<compile_context>
chip_gen: v7x
topology: tpu7x:2x2x1
jax: 0.10.0
libtpu: 0.0.40
codegen_flags: <defaults>
</compile_context>

<pallas_src>
import jax
import jax.numpy as jnp
from jax.experimental import pallas as pl
from jax.experimental.pallas import tpu as pltpu


def _round_up(n, m):
    return ((n + m - 1) // m) * m


# ----------------------------------------------------------------------------
# Fused conv + bias + ReLU + 2x2 max-pool kernel (batched along lanes)
# ----------------------------------------------------------------------------
def _conv_relu_pool_kernel(a_ref, w_ref, b_ref, o_ref):
    # a_ref: (4, K, n_blk)   phase-split patches, lane dim = flattened (batch, pooled-pos)
    # w_ref: (Cout_p, K)     conv weight (rows zero-padded to a sublane multiple)
    # b_ref: (Cout_p, 1)     f32 bias
    # o_ref: (Cout_p, n_blk) pooled, ReLU'd output slab (f32, lane-dense)
    w = w_ref[...]
    # relu(max_pool(conv)) == relu(max over the 4 pool phases) with the shared
    # bias folded after the max (bias is phase-independent, relu/max commute).
    y = jnp.dot(w, a_ref[0], preferred_element_type=jnp.float32)
    for ph in range(1, 4):
        y = jnp.maximum(y, jnp.dot(w, a_ref[ph], preferred_element_type=jnp.float32))
    o_ref[...] = jnp.maximum(y + b_ref[...], 0.0).astype(o_ref.dtype)


def conv_relu_pool(a, w, b, *, n_blk_target=4096):
    # a: (4, K, N) phase-split patches (N = B * pooled_spatial), dtype = dot dtype
    # w: (Cout, Cin, kh, kw) f32 ;  b: (Cout,) f32
    _, K, N = a.shape
    Cout = w.shape[0]
    Cout_p = _round_up(Cout, 8)                       # sublane-aligned output rows
    w2 = jnp.pad(w.reshape(Cout, K), ((0, Cout_p - Cout), (0, 0))).astype(a.dtype)
    b2 = jnp.pad(b, (0, Cout_p - Cout)).reshape(Cout_p, 1).astype(jnp.float32)

    # Lane-dense blocking of the fused (batch, spatial) dim.  n_blk is a
    # multiple of 128; columns are independent so block boundaries need not
    # align with image boundaries.  Padded columns (zeros) are sliced off.
    n_blk = min(_round_up(N, 128), n_blk_target)
    n_pad = _round_up(N, n_blk)
    if n_pad != N:
        a = jnp.pad(a, ((0, 0), (0, 0), (0, n_pad - N)))

    itemsize = jnp.dtype(a.dtype).itemsize
    flops = 2 * 4 * Cout_p * K * n_pad
    bytes_accessed = (itemsize * (4 * K * n_pad + Cout_p * K)
                      + 4 * (Cout_p + Cout_p * n_pad))

    out = pl.pallas_call(
        _conv_relu_pool_kernel,
        grid=(n_pad // n_blk,),
        in_specs=[
            pl.BlockSpec((4, K, n_blk), lambda i: (0, 0, i)),
            pl.BlockSpec((Cout_p, K), lambda i: (0, 0)),
            pl.BlockSpec((Cout_p, 1), lambda i: (0, 0)),
        ],
        out_specs=pl.BlockSpec((Cout_p, n_blk), lambda i: (0, i)),
        out_shape=jax.ShapeDtypeStruct((Cout_p, n_pad), jnp.float32),
        compiler_params=pltpu.CompilerParams(dimension_semantics=("parallel",)),
        cost_estimate=pl.CostEstimate(
            flops=flops, transcendentals=0, bytes_accessed=bytes_accessed),
    )(a, w2, b2)
    return out[:Cout, :N]                             # (Cout, B*L)


# ----------------------------------------------------------------------------
# Fused fc1 -> relu -> fc2 -> relu -> fc3 -> relu kernel (batch-tiled)
# ----------------------------------------------------------------------------
def _fc_fused_kernel(x_ref, w1_ref, b1_ref, w2_ref, b2_ref, w3_ref, b3_ref, o_ref):
    h = jnp.dot(x_ref[...], w1_ref[...], preferred_element_type=jnp.float32)
    h = jnp.maximum(h + b1_ref[...], 0.0)
    h = jnp.dot(h, w2_ref[...], preferred_element_type=jnp.float32)
    h = jnp.maximum(h + b2_ref[...], 0.0)
    h = jnp.dot(h, w3_ref[...], preferred_element_type=jnp.float32)
    o_ref[...] = jnp.maximum(h + b3_ref[...], 0.0).astype(o_ref.dtype)


def fc_fused(x, w1, b1, w2, b2, w3, b3, *, tb=256):
    B, D = x.shape
    N1, N2, N3 = w1.shape[1], w2.shape[1], w3.shape[1]
    # Pad all hidden/output lane dims to multiples of 128 (zero rows/cols keep
    # the math exact through relu); logits are sliced back afterwards.
    H1, H2, NO = _round_up(N1, 128), _round_up(N2, 128), _round_up(N3, 128)
    w1p = jnp.pad(w1, ((0, 0), (0, H1 - N1)))
    b1p = jnp.pad(b1, (0, H1 - N1)).reshape(1, H1)
    w2p = jnp.pad(w2, ((0, H1 - w2.shape[0]), (0, H2 - N2)))
    b2p = jnp.pad(b2, (0, H2 - N2)).reshape(1, H2)
    w3p = jnp.pad(w3, ((0, H2 - w3.shape[0]), (0, NO - N3)))
    b3p = jnp.pad(b3, (0, NO - N3)).reshape(1, NO)

    # Batch tiling: single block for small B, otherwise 256-row tiles
    # (>= 256 feeds the v6e/v7x 256-wide MXU; multiple of 8 for sublanes).
    if B <= tb:
        TB, Bp = B, B
    else:
        TB = tb
        Bp = _round_up(B, TB)
        x = jnp.pad(x, ((0, Bp - B), (0, 0)))

    flops = 2 * Bp * (D * H1 + H1 * H2 + H2 * NO)
    bytes_accessed = 4 * (Bp * D + D * H1 + H1 * H2 + H2 * NO
                          + H1 + H2 + NO + Bp * NO)

    out = pl.pallas_call(
        _fc_fused_kernel,
        grid=(Bp // TB,),
        in_specs=[
            pl.BlockSpec((TB, D), lambda i: (i, 0)),
            pl.BlockSpec((D, H1), lambda i: (0, 0)),
            pl.BlockSpec((1, H1), lambda i: (0, 0)),
            pl.BlockSpec((H1, H2), lambda i: (0, 0)),
            pl.BlockSpec((1, H2), lambda i: (0, 0)),
            pl.BlockSpec((H2, NO), lambda i: (0, 0)),
            pl.BlockSpec((1, NO), lambda i: (0, 0)),
        ],
        out_specs=pl.BlockSpec((TB, NO), lambda i: (i, 0)),
        out_shape=jax.ShapeDtypeStruct((Bp, NO), jnp.float32),
        compiler_params=pltpu.CompilerParams(dimension_semantics=("parallel",)),
        cost_estimate=pl.CostEstimate(
            flops=flops, transcendentals=0, bytes_accessed=bytes_accessed),
    )(x, w1p, b1p, w2p, b2p, w3p, b3p)
    return out[:B, :N3]


# ----------------------------------------------------------------------------
# Glue: phase-split patch extraction (pure data movement, emitted in bf16).
# Input is (C, B, H, W); output A[2p+q, c*kh*kw + i*kw + j, b*Hp*Wp + hp*Wp + wp]
#   = x[c, b, 2hp+p+i, 2wp+q+j]
# i.e. im2col pre-grouped by the four 2x2 pool phases, with the fused
# (batch, pooled position) index on lanes.
# ----------------------------------------------------------------------------
def pooled_conv_patches(x_cbhw, kh, kw, dtype):
    C, B, H, W = x_cbhw.shape
    Ho, Wo = H - kh + 1, W - kw + 1
    Hp, Wp = Ho // 2, Wo // 2
    phases = []
    for p in range(2):
        for q in range(2):
            cols = []
            for i in range(kh):
                for j in range(kw):
                    sl = x_cbhw[:, :, p + i::2, q + j::2][:, :, :Hp, :Wp]  # (C,B,Hp,Wp)
                    cols.append(sl)
            patch = jnp.stack(cols, axis=1)                  # (C, kh*kw, B, Hp, Wp)
            phases.append(patch.reshape(C * kh * kw, B * Hp * Wp))
    return jnp.stack(phases, axis=0).astype(dtype), (Hp, Wp)  # (4, K, B*L)


# ----------------------------------------------------------------------------
# Parameters (deterministic init in-script)
# ----------------------------------------------------------------------------
def init_params(key):
    ks = jax.random.split(key, 10)

    def uni(k, shape, fan_in):
        bound = 1.0 / jnp.sqrt(jnp.float32(fan_in))
        return jax.random.uniform(k, shape, jnp.float32, -bound, bound)

    return {
        "conv1_w": uni(ks[0], (6, 3, 5, 5), 3 * 5 * 5),
        "conv1_b": uni(ks[1], (6,), 3 * 5 * 5),
        "conv2_w": uni(ks[2], (16, 6, 5, 5), 6 * 5 * 5),
        "conv2_b": uni(ks[3], (16,), 6 * 5 * 5),
        # Linear stored as [in, out] (== PyTorch weight.T)
        "fc1_w": uni(ks[4], (16 * 5 * 5, 120), 16 * 5 * 5),
        "fc1_b": uni(ks[5], (120,), 16 * 5 * 5),
        "fc2_w": uni(ks[6], (120, 84), 120),
        "fc2_b": uni(ks[7], (84,), 120),
        "fc3_w": uni(ks[8], (84, 10), 84),
        "fc3_b": uni(ks[9], (10,), 84),
    }


# ----------------------------------------------------------------------------
# Forward pass (mirrors Net.forward) — 3 Pallas launches total
# ----------------------------------------------------------------------------
def net_forward(params, x, *, dot_dtype=jnp.bfloat16):
    # x: [B, 3, 32, 32], NCHW, float32
    B = x.shape[0]
    x_cbhw = jnp.transpose(x, (1, 0, 2, 3))                        # (3, B, 32, 32)

    # stage 1: conv1 + relu + 2x2 max-pool (fused)
    a1, (hp1, wp1) = pooled_conv_patches(x_cbhw, 5, 5, dot_dtype)  # (4, 75, B*196)
    y1 = conv_relu_pool(a1, params["conv1_w"], params["conv1_b"])  # (6, B*196)
    x2 = y1.reshape(6, B, hp1, wp1)                                # CBHW, no transpose

    # stage 2: conv2 + relu + 2x2 max-pool (fused)
    a2, (hp2, wp2) = pooled_conv_patches(x2, 5, 5, dot_dtype)      # (4, 150, B*25)
    y2 = conv_relu_pool(a2, params["conv2_w"], params["conv2_b"])  # (16, B*25)

    # flatten matches PyTorch .view(-1, 16*5*5) (C, H, W order per image)
    xf = jnp.transpose(y2.reshape(16, B, hp2 * wp2), (1, 0, 2)).reshape(B, 16 * hp2 * wp2)

    # stage 3: fc1/fc2/fc3 + relu (fused, batch-tiled, f32 — tiny GEMMs)
    return fc_fused(xf,
                    params["fc1_w"], params["fc1_b"],
                    params["fc2_w"], params["fc2_b"],
                    params["fc3_w"], params["fc3_b"])              # (B, 10)


# ----------------------------------------------------------------------------
# Pure-JAX reference (for correctness check only)
# ----------------------------------------------------------------------------
def reference_forward(params, x):
    def conv(x, w, b):
        y = jax.lax.conv_general_dilated(
            x, w, (1, 1), "VALID", dimension_numbers=("NCHW", "OIHW", "NCHW"))
        return jax.nn.relu(y + b[None, :, None, None])

    def pool(x):
        return jax.lax.reduce_window(x, -jnp.inf, jax.lax.max,
                                     (1, 1, 2, 2), (1, 1, 2, 2), "VALID")

    x = pool(conv(x, params["conv1_w"], params["conv1_b"]))
    x = pool(conv(x, params["conv2_w"], params["conv2_b"]))
    x = x.reshape(x.shape[0], -1)
    x = jax.nn.relu(x @ params["fc1_w"] + params["fc1_b"])
    x = jax.nn.relu(x @ params["fc2_w"] + params["fc2_b"])
    x = jax.nn.relu(x @ params["fc3_w"] + params["fc3_b"])
    return x


if __name__ == "__main__":
    key = jax.random.PRNGKey(0)
    pkey, xkey = jax.random.split(key)
    params = init_params(pkey)
    # Conv2d(3,6,5) -> pool2 -> Conv2d(6,16,5) -> pool2 -> 16*5*5 implies 32x32 input
    x = jax.random.normal(xkey, (2, 3, 32, 32), jnp.float32)

    ref = reference_forward(params, x)

    # Production path: bf16 conv-dot inputs, f32 accumulate/elementwise.
    out = jax.jit(net_forward)(params, x)
    out = jax.block_until_ready(out)
    assert out.shape == (2, 10) and out.dtype == jnp.float32
    assert bool(jnp.all(out >= 0.0))                 # final relu
    assert bool(jnp.allclose(out, ref, rtol=5e-2, atol=1e-2))   # bf16 inputs -> loose tol

    # Strict check of the kernel math with f32 dot inputs.
    out_f32 = jax.jit(lambda p, xx: net_forward(p, xx, dot_dtype=jnp.float32))(params, x)
    out_f32 = jax.block_until_ready(out_f32)
    assert bool(jnp.allclose(out_f32, ref, rtol=1e-3, atol=1e-4))

    print("KERNEL_OK")
</pallas_src>

<mosaic_0001>
module attributes {stable_mosaic.version = 11 : i64} {
  func.func @_conv_relu_pool_kernel(%arg0: i32, %arg1: memref<4x75x512xbf16, #tpu.memory_space<vmem>>, %arg2: memref<8x75xbf16, #tpu.memory_space<vmem>>, %arg3: memref<8x1xf32, #tpu.memory_space<vmem>>, %arg4: memref<8x512xf32, #tpu.memory_space<vmem>>) attributes {dimension_semantics = [#tpu.dimension_semantics<parallel>], iteration_bounds = array<i64: 1>, scalar_prefetch = 0 : i64, scratch_operands = 0 : i64, tpu.core_type = #tpu.core_type<tc>, window_params = [{transform_indices = @transform_0, window_bounds = array<i64: 4, 75, 512>}, {pipeline_mode = #tpu.pipeline_mode<synchronous>, transform_indices = @transform_1, window_bounds = array<i64: 8, 75>}, {pipeline_mode = #tpu.pipeline_mode<synchronous>, transform_indices = @transform_2, window_bounds = array<i64: 8, 1>}, {transform_indices = @transform_3, window_bounds = array<i64: 8, 512>}]} {
    %c0 = arith.constant 0 : index
    %c0_0 = arith.constant 0 : index
    %0 = vector.load %arg2[%c0, %c0_0] : memref<8x75xbf16, #tpu.memory_space<vmem>>, vector<8x75xbf16>
    %c0_1 = arith.constant 0 : index
    %c0_2 = arith.constant 0 : index
    %c0_3 = arith.constant 0 : index
    %1 = vector.load %arg1[%c0_1, %c0_2, %c0_3] : memref<4x75x512xbf16, #tpu.memory_space<vmem>>, vector<1x75x512xbf16>
    %2 = vector.shape_cast %1 : vector<1x75x512xbf16> to vector<75x512xbf16>
    %cst = arith.constant dense<0.000000e+00> : vector<8x512xf32>
    %3 = tpu.matmul %0, %2, %cst {dimension_numbers = #tpu.dot_dimension_numbers<[1], [0], [0], [1], [0, 0, 1, 1], [], []>} : vector<8x75xbf16>, vector<75x512xbf16>, vector<8x512xf32> -> vector<8x512xf32>
    %c1 = arith.constant 1 : index
    %c0_4 = arith.constant 0 : index
    %c0_5 = arith.constant 0 : index
    %4 = vector.load %arg1[%c1, %c0_4, %c0_5] : memref<4x75x512xbf16, #tpu.memory_space<vmem>>, vector<1x75x512xbf16>
    %5 = vector.shape_cast %4 : vector<1x75x512xbf16> to vector<75x512xbf16>
    %cst_6 = arith.constant dense<0.000000e+00> : vector<8x512xf32>
    %6 = tpu.matmul %0, %5, %cst_6 {dimension_numbers = #tpu.dot_dimension_numbers<[1], [0], [0], [1], [0, 0, 1, 1], [], []>} : vector<8x75xbf16>, vector<75x512xbf16>, vector<8x512xf32> -> vector<8x512xf32>
    %7 = arith.maximumf %3, %6 : vector<8x512xf32>
    %c2 = arith.constant 2 : index
    %c0_7 = arith.constant 0 : index
    %c0_8 = arith.constant 0 : index
    %8 = vector.load %arg1[%c2, %c0_7, %c0_8] : memref<4x75x512xbf16, #tpu.memory_space<vmem>>, vector<1x75x512xbf16>
    %9 = vector.shape_cast %8 : vector<1x75x512xbf16> to vector<75x512xbf16>
    %cst_9 = arith.constant dense<0.000000e+00> : vector<8x512xf32>
    %10 = tpu.matmul %0, %9, %cst_9 {dimension_numbers = #tpu.dot_dimension_numbers<[1], [0], [0], [1], [0, 0, 1, 1], [], []>} : vector<8x75xbf16>, vector<75x512xbf16>, vector<8x512xf32> -> vector<8x512xf32>
    %11 = arith.maximumf %7, %10 : vector<8x512xf32>
    %c3 = arith.constant 3 : index
    %c0_10 = arith.constant 0 : index
    %c0_11 = arith.constant 0 : index
    %12 = vector.load %arg1[%c3, %c0_10, %c0_11] : memref<4x75x512xbf16, #tpu.memory_space<vmem>>, vector<1x75x512xbf16>
    %13 = vector.shape_cast %12 : vector<1x75x512xbf16> to vector<75x512xbf16>
    %cst_12 = arith.constant dense<0.000000e+00> : vector<8x512xf32>
    %14 = tpu.matmul %0, %13, %cst_12 {dimension_numbers = #tpu.dot_dimension_numbers<[1], [0], [0], [1], [0, 0, 1, 1], [], []>} : vector<8x75xbf16>, vector<75x512xbf16>, vector<8x512xf32> -> vector<8x512xf32>
    %15 = arith.maximumf %11, %14 : vector<8x512xf32>
    %c0_13 = arith.constant 0 : index
    %c0_14 = arith.constant 0 : index
    %16 = vector.load %arg3[%c0_13, %c0_14] : memref<8x1xf32, #tpu.memory_space<vmem>>, vector<8x1xf32>
    %17 = vector.broadcast %16 : vector<8x1xf32> to vector<8x512xf32>
    %18 = arith.addf %15, %17 : vector<8x512xf32>
    %cst_15 = arith.constant 0.000000e+00 : f32
    %19 = vector.broadcast %cst_15 : f32 to vector<8x512xf32>
    %20 = arith.maximumf %18, %19 : vector<8x512xf32>
    %c0_16 = arith.constant 0 : index
    %c0_17 = arith.constant 0 : index
    %21 = vector.load %arg4[%c0_16, %c0_17] : memref<8x512xf32, #tpu.memory_space<vmem>>, vector<8x512xf32>
    tpu.vector_store %arg4[%c0_16, %c0_17], %20 {strides = array<i32>} : memref<8x512xf32, #tpu.memory_space<vmem>>, vector<8x512xf32>,
    return
  }
  func.func @transform_0(%arg0: i32) -> (i32, i32, i32) {
    %c0_i32 = arith.constant 0 : i32
    %c0_i32_0 = arith.constant 0 : i32
    %c0_i32_1 = arith.constant 0 : i32
    return %c0_i32, %c0_i32_0, %arg0 : i32, i32, i32
  }
  func.func @transform_1(%arg0: i32) -> (i32, i32) {
    %c0_i32 = arith.constant 0 : i32
    %c0_i32_0 = arith.constant 0 : i32
    %c0_i32_1 = arith.constant 0 : i32
    return %c0_i32, %c0_i32_0 : i32, i32
  }
  func.func @transform_2(%arg0: i32) -> (i32, i32) {
    %c0_i32 = arith.constant 0 : i32
    %c0_i32_0 = arith.constant 0 : i32
    %c0_i32_1 = arith.constant 0 : i32
    return %c0_i32, %c0_i32_0 : i32, i32
  }
  func.func @transform_3(%arg0: i32) -> (i32, i32) {
    %c0_i32 = arith.constant 0 : i32
    %c0_i32_0 = arith.constant 0 : i32
    return %c0_i32, %arg0 : i32, i32
  }
}

module attributes {stable_mosaic.version = 11 : i64} {
  func.func @_conv_relu_pool_kernel(%arg0: i32, %arg1: memref<4x150x128xbf16, #tpu.memory_space<vmem>>, %arg2: memref<16x150xbf16, #tpu.memory_space<vmem>>, %arg3: memref<16x1xf32, #tpu.memory_space<vmem>>, %arg4: memref<16x128xf32, #tpu.memory_space<vmem>>) attributes {dimension_semantics = [#tpu.dimension_semantics<parallel>], iteration_bounds = array<i64: 1>, scalar_prefetch = 0 : i64, scratch_operands = 0 : i64, tpu.core_type = #tpu.core_type<tc>, window_params = [{transform_indices = @transform_0, window_bounds = array<i64: 4, 150, 128>}, {pipeline_mode = #tpu.pipeline_mode<synchronous>, transform_indices = @transform_1, window_bounds = array<i64: 16, 150>}, {pipeline_mode = #tpu.pipeline_mode<synchronous>, transform_indices = @transform_2, window_bounds = array<i64: 16, 1>}, {transform_indices = @transform_3, window_bounds = array<i64: 16, 128>}]} {
    %c0 = arith.constant 0 : index
    %c0_0 = arith.constant 0 : index
    %0 = vector.load %arg2[%c0, %c0_0] : memref<16x150xbf16, #tpu.memory_space<vmem>>, vector<16x150xbf16>
    %c0_1 = arith.constant 0 : index
    %c0_2 = arith.constant 0 : index
    %c0_3 = arith.constant 0 : index
    %1 = vector.load %arg1[%c0_1, %c0_2, %c0_3] : memref<4x150x128xbf16, #tpu.memory_space<vmem>>, vector<1x150x128xbf16>
    %2 = vector.shape_cast %1 : vector<1x150x128xbf16> to vector<150x128xbf16>
    %cst = arith.constant dense<0.000000e+00> : vector<16x128xf32>
    %3 = tpu.matmul %0, %2, %cst {dimension_numbers = #tpu.dot_dimension_numbers<[1], [0], [0], [1], [0, 0, 1, 1], [], []>} : vector<16x150xbf16>, vector<150x128xbf16>, vector<16x128xf32> -> vector<16x128xf32>
    %c1 = arith.constant 1 : index
    %c0_4 = arith.constant 0 : index
    %c0_5 = arith.constant 0 : index
    %4 = vector.load %arg1[%c1, %c0_4, %c0_5] : memref<4x150x128xbf16, #tpu.memory_space<vmem>>, vector<1x150x128xbf16>
    %5 = vector.shape_cast %4 : vector<1x150x128xbf16> to vector<150x128xbf16>
    %cst_6 = arith.constant dense<0.000000e+00> : vector<16x128xf32>
    %6 = tpu.matmul %0, %5, %cst_6 {dimension_numbers = #tpu.dot_dimension_numbers<[1], [0], [0], [1], [0, 0, 1, 1], [], []>} : vector<16x150xbf16>, vector<150x128xbf16>, vector<16x128xf32> -> vector<16x128xf32>
    %7 = arith.maximumf %3, %6 : vector<16x128xf32>
    %c2 = arith.constant 2 : index
    %c0_7 = arith.constant 0 : index
    %c0_8 = arith.constant 0 : index
    %8 = vector.load %arg1[%c2, %c0_7, %c0_8] : memref<4x150x128xbf16, #tpu.memory_space<vmem>>, vector<1x150x128xbf16>
    %9 = vector.shape_cast %8 : vector<1x150x128xbf16> to vector<150x128xbf16>
    %cst_9 = arith.constant dense<0.000000e+00> : vector<16x128xf32>
    %10 = tpu.matmul %0, %9, %cst_9 {dimension_numbers = #tpu.dot_dimension_numbers<[1], [0], [0], [1], [0, 0, 1, 1], [], []>} : vector<16x150xbf16>, vector<150x128xbf16>, vector<16x128xf32> -> vector<16x128xf32>
    %11 = arith.maximumf %7, %10 : vector<16x128xf32>
    %c3 = arith.constant 3 : index
    %c0_10 = arith.constant 0 : index
    %c0_11 = arith.constant 0 : index
    %12 = vector.load %arg1[%c3, %c0_10, %c0_11] : memref<4x150x128xbf16, #tpu.memory_space<vmem>>, vector<1x150x128xbf16>
    %13 = vector.shape_cast %12 : vector<1x150x128xbf16> to vector<150x128xbf16>
    %cst_12 = arith.constant dense<0.000000e+00> : vector<16x128xf32>
    %14 = tpu.matmul %0, %13, %cst_12 {dimension_numbers = #tpu.dot_dimension_numbers<[1], [0], [0], [1], [0, 0, 1, 1], [], []>} : vector<16x150xbf16>, vector<150x128xbf16>, vector<16x128xf32> -> vector<16x128xf32>
    %15 = arith.maximumf %11, %14 : vector<16x128xf32>
    %c0_13 = arith.constant 0 : index
    %c0_14 = arith.constant 0 : index
    %16 = vector.load %arg3[%c0_13, %c0_14] : memref<16x1xf32, #tpu.memory_space<vmem>>, vector<16x1xf32>
    %17 = vector.broadcast %16 : vector<16x1xf32> to vector<16x128xf32>
    %18 = arith.addf %15, %17 : vector<16x128xf32>
    %cst_15 = arith.constant 0.000000e+00 : f32
    %19 = vector.broadcast %cst_15 : f32 to vector<16x128xf32>
    %20 = arith.maximumf %18, %19 : vector<16x128xf32>
    %c0_16 = arith.constant 0 : index
    %c0_17 = arith.constant 0 : index
    %21 = vector.load %arg4[%c0_16, %c0_17] : memref<16x128xf32, #tpu.memory_space<vmem>>, vector<16x128xf32>
    tpu.vector_store %arg4[%c0_16, %c0_17], %20 {strides = array<i32>} : memref<16x128xf32, #tpu.memory_space<vmem>>, vector<16x128xf32>,
    return
  }
  func.func @transform_0(%arg0: i32) -> (i32, i32, i32) {
    %c0_i32 = arith.constant 0 : i32
    %c0_i32_0 = arith.constant 0 : i32
    %c0_i32_1 = arith.constant 0 : i32
    return %c0_i32, %c0_i32_0, %arg0 : i32, i32, i32
  }
  func.func @transform_1(%arg0: i32) -> (i32, i32) {
    %c0_i32 = arith.constant 0 : i32
    %c0_i32_0 = arith.constant 0 : i32
    %c0_i32_1 = arith.constant 0 : i32
    return %c0_i32, %c0_i32_0 : i32, i32
  }
  func.func @transform_2(%arg0: i32) -> (i32, i32) {
    %c0_i32 = arith.constant 0 : i32
    %c0_i32_0 = arith.constant 0 : i32
    %c0_i32_1 = arith.constant 0 : i32
    return %c0_i32, %c0_i32_0 : i32, i32
  }
  func.func @transform_3(%arg0: i32) -> (i32, i32) {
    %c0_i32 = arith.constant 0 : i32
    %c0_i32_0 = arith.constant 0 : i32
    return %c0_i32, %arg0 : i32, i32
  }
}

module attributes {stable_mosaic.version = 11 : i64} {
  func.func @_fc_fused_kernel(%arg0: i32, %arg1: memref<2x400xf32, #tpu.memory_space<vmem>>, %arg2: memref<400x128xf32, #tpu.memory_space<vmem>>, %arg3: memref<1x128xf32, #tpu.memory_space<vmem>>, %arg4: memref<128x128xf32, #tpu.memory_space<vmem>>, %arg5: memref<1x128xf32, #tpu.memory_space<vmem>>, %arg6: memref<128x128xf32, #tpu.memory_space<vmem>>, %arg7: memref<1x128xf32, #tpu.memory_space<vmem>>, %arg8: memref<2x128xf32, #tpu.memory_space<vmem>>) attributes {dimension_semantics = [#tpu.dimension_semantics<parallel>], iteration_bounds = array<i64: 1>, scalar_prefetch = 0 : i64, scratch_operands = 0 : i64, tpu.core_type = #tpu.core_type<tc>, window_params = [{transform_indices = @transform_0, window_bounds = array<i64: 2, 400>}, {pipeline_mode = #tpu.pipeline_mode<synchronous>, transform_indices = @transform_1, window_bounds = array<i64: 400, 128>}, {pipeline_mode = #tpu.pipeline_mode<synchronous>, transform_indices = @transform_2, window_bounds = array<i64: 1, 128>}, {pipeline_mode = #tpu.pipeline_mode<synchronous>, transform_indices = @transform_3, window_bounds = array<i64: 128, 128>}, {pipeline_mode = #tpu.pipeline_mode<synchronous>, transform_indices = @transform_4, window_bounds = array<i64: 1, 128>}, {pipeline_mode = #tpu.pipeline_mode<synchronous>, transform_indices = @transform_5, window_bounds = array<i64: 128, 128>}, {pipeline_mode = #tpu.pipeline_mode<synchronous>, transform_indices = @transform_6, window_bounds = array<i64: 1, 128>}, {transform_indices = @transform_7, window_bounds = array<i64: 2, 128>}]} {
    %c0 = arith.constant 0 : index
    %c0_0 = arith.constant 0 : index
    %0 = vector.load %arg1[%c0, %c0_0] : memref<2x400xf32, #tpu.memory_space<vmem>>, vector<2x400xf32>
    %c0_1 = arith.constant 0 : index
    %c0_2 = arith.constant 0 : index
    %1 = vector.load %arg2[%c0_1, %c0_2] : memref<400x128xf32, #tpu.memory_space<vmem>>, vector<400x128xf32>
    %cst = arith.constant dense<0.000000e+00> : vector<2x128xf32>
    %2 = tpu.matmul %0, %1, %cst {dimension_numbers = #tpu.dot_dimension_numbers<[1], [0], [0], [1], [0, 0, 1, 1], [], []>} : vector<2x400xf32>, vector<400x128xf32>, vector<2x128xf32> -> vector<2x128xf32>
    %c0_3 = arith.constant 0 : index
    %c0_4 = arith.constant 0 : index
    %3 = vector.load %arg3[%c0_3, %c0_4] : memref<1x128xf32, #tpu.memory_space<vmem>>, vector<1x128xf32>
    %4 = vector.broadcast %3 : vector<1x128xf32> to vector<2x128xf32>
    %5 = arith.addf %2, %4 : vector<2x128xf32>
    %cst_5 = arith.constant 0.000000e+00 : f32
    %6 = vector.broadcast %cst_5 : f32 to vector<2x128xf32>
    %7 = arith.maximumf %5, %6 : vector<2x128xf32>
    %c0_6 = arith.constant 0 : index
    %c0_7 = arith.constant 0 : index
    %8 = vector.load %arg4[%c0_6, %c0_7] : memref<128x128xf32, #tpu.memory_space<vmem>>, vector<128x128xf32>
    %cst_8 = arith.constant dense<0.000000e+00> : vector<2x128xf32>
    %9 = tpu.matmul %7, %8, %cst_8 {dimension_numbers = #tpu.dot_dimension_numbers<[1], [0], [0], [1], [0, 0, 1, 1], [], []>} : vector<2x128xf32>, vector<128x128xf32>, vector<2x128xf32> -> vector<2x128xf32>
    %c0_9 = arith.constant 0 : index
    %c0_10 = arith.constant 0 : index
    %10 = vector.load %arg5[%c0_9, %c0_10] : memref<1x128xf32, #tpu.memory_space<vmem>>, vector<1x128xf32>
    %11 = vector.broadcast %10 : vector<1x128xf32> to vector<2x128xf32>
    %12 = arith.addf %9, %11 : vector<2x128xf32>
    %cst_11 = arith.constant 0.000000e+00 : f32
    %13 = vector.broadcast %cst_11 : f32 to vector<2x128xf32>
    %14 = arith.maximumf %12, %13 : vector<2x128xf32>
    %c0_12 = arith.constant 0 : index
    %c0_13 = arith.constant 0 : index
    %15 = vector.load %arg6[%c0_12, %c0_13] : memref<128x128xf32, #tpu.memory_space<vmem>>, vector<128x128xf32>
    %cst_14 = arith.constant dense<0.000000e+00> : vector<2x128xf32>
    %16 = tpu.matmul %14, %15, %cst_14 {dimension_numbers = #tpu.dot_dimension_numbers<[1], [0], [0], [1], [0, 0, 1, 1], [], []>} : vector<2x128xf32>, vector<128x128xf32>, vector<2x128xf32> -> vector<2x128xf32>
    %c0_15 = arith.constant 0 : index
    %c0_16 = arith.constant 0 : index
    %17 = vector.load %arg7[%c0_15, %c0_16] : memref<1x128xf32, #tpu.memory_space<vmem>>, vector<1x128xf32>
    %18 = vector.broadcast %17 : vector<1x128xf32> to vector<2x128xf32>
    %19 = arith.addf %16, %18 : vector<2x128xf32>
    %cst_17 = arith.constant 0.000000e+00 : f32
    %20 = vector.broadcast %cst_17 : f32 to vector<2x128xf32>
    %21 = arith.maximumf %19, %20 : vector<2x128xf32>
    %c0_18 = arith.constant 0 : index
    %c0_19 = arith.constant 0 : index
    %22 = vector.load %arg8[%c0_18, %c0_19] : memref<2x128xf32, #tpu.memory_space<vmem>>, vector<2x128xf32>
    tpu.vector_store %arg8[%c0_18, %c0_19], %21 {strides = array<i32>} : memref<2x128xf32, #tpu.memory_space<vmem>>, vector<2x128xf32>,
    return
  }
  func.func @transform_0(%arg0: i32) -> (i32, i32) {
    %c0_i32 = arith.constant 0 : i32
    %c0_i32_0 = arith.constant 0 : i32
    return %arg0, %c0_i32 : i32, i32
  }
  func.func @transform_1(%arg0: i32) -> (i32, i32) {
    %c0_i32 = arith.constant 0 : i32
    %c0_i32_0 = arith.constant 0 : i32
    %c0_i32_1 = arith.constant 0 : i32
    return %c0_i32, %c0_i32_0 : i32, i32
  }
  func.func @transform_2(%arg0: i32) -> (i32, i32) {
    %c0_i32 = arith.constant 0 : i32
    %c0_i32_0 = arith.constant 0 : i32
    %c0_i32_1 = arith.constant 0 : i32
    return %c0_i32, %c0_i32_0 : i32, i32
  }
  func.func @transform_3(%arg0: i32) -> (i32, i32) {
    %c0_i32 = arith.constant 0 : i32
    %c0_i32_0 = arith.constant 0 : i32
    %c0_i32_1 = arith.constant 0 : i32
    return %c0_i32, %c0_i32_0 : i32, i32
  }
  func.func @transform_4(%arg0: i32) -> (i32, i32) {
    %c0_i32 = arith.constant 0 : i32
    %c0_i32_0 = arith.constant 0 : i32
    %c0_i32_1 = arith.constant 0 : i32
    return %c0_i32, %c0_i32_0 : i32, i32
  }
  func.func @transform_5(%arg0: i32) -> (i32, i32) {
    %c0_i32 = arith.constant 0 : i32
    %c0_i32_0 = arith.constant 0 : i32
    %c0_i32_1 = arith.constant 0 : i32
    return %c0_i32, %c0_i32_0 : i32, i32
  }
  func.func @transform_6(%arg0: i32) -> (i32, i32) {
    %c0_i32 = arith.constant 0 : i32
    %c0_i32_0 = arith.constant 0 : i32
    %c0_i32_1 = arith.constant 0 : i32
    return %c0_i32, %c0_i32_0 : i32, i32
  }
  func.func @transform_7(%arg0: i32) -> (i32, i32) {
    %c0_i32 = arith.constant 0 : i32
    %c0_i32_0 = arith.constant 0 : i32
    return %arg0, %c0_i32 : i32, i32
  }
}

</mosaic_0001>

<llo_original>
// kernel: net_forward.3
$region0: #{net_forward.3}
  #allocation0 [shape = 'u32[]', space=smem, size = 0x4, offset = 0x4, fixed_abs, tag = 'smem constant byte address 0x4 - core index']
  #allocation1 [shape = 'u32[144,128]{1,0:T(1,128)}', space=vmem, size = 0x12000, scoped, tag = 'internal scratch']
  %s0 = inlined_call_operand.vmem [shape: bf16[4,75,512], index: 0, kind: input, shape index: {}]
  %s1 = inlined_call_operand.vmem [shape: bf16[8,75], index: 1, kind: input, shape index: {}]
  %s2 = inlined_call_operand.vmem [shape: f32[8,1], index: 2, kind: input, shape index: {}]
  %s3 = inlined_call_operand.vmem [shape: f32[8,512], index: 3, kind: output, shape index: {}]
  %s4 = sld [smem:[#allocation0]]
  $region22: #{net_forward.3} parent=0
    _
  %s6 = ssub.s32 1, %s4
  %s7 = scalar_select 0, %s6, %s4
  // Predicated region
  $region2: #{net_forward.3} parent=0 // pred_check
    _
  $region3: #{net_forward.3} parent=0 // pred_check_branch
    %9 = sbr.rel (0) target = $region5
  $region4: #{net_forward.3} parent=0 // pred_region
    _
  $region5: #{net_forward.3} parent=0 // pred_fallthru
    _
  // Predicated region
  $region6: #{net_forward.3} parent=0 // pred_check
    _
  $region7: #{net_forward.3} parent=0 // pred_check_branch
    %11 = sbr.rel (0) target = $region9
  $region8: #{net_forward.3} parent=0 // pred_region
    _
  $region9: #{net_forward.3} parent=0 // pred_fallthru
    _
  // Predicated region
  $region10: #{net_forward.3} parent=0 // pred_check
    _
  $region11: #{net_forward.3} parent=0 // pred_check_branch
    %13 = sbr.rel (0) target = $region13
  $region12: #{net_forward.3} parent=0 // pred_region
    _
  $region13: #{net_forward.3} parent=0 // pred_fallthru
    _
  %v15 = vld [vmem:[%s1] sm:$0xf]
  %v16 = vld [vmem:[%s0] sm:$0xff]
  %v17 = vld [vmem:[%s0 + $0x8] sm:$0xff]
  %v18 = vld [vmem:[%s0 + $0x10] sm:$0xff]
  %v19 = vld [vmem:[%s0 + $0x18] sm:$0xff]
  %v20 = vld [vmem:[%s0 + $0x20] sm:$0xff]
  %v21 = vld [vmem:[%s0 + $0x28] sm:$0xff]
  %v22 = vld [vmem:[%s0 + $0x30] sm:$0xff]
  %v23 = vld [vmem:[%s0 + $0x38] sm:$0xff]
  %v24 = vld [vmem:[%s0 + $0x40] sm:$0xff]
  %v25 = vld [vmem:[%s0 + $0x48] sm:$0xff]
  %v26 = vld [vmem:[%s0 + $0x50] sm:$0xff]
  %v27 = vld [vmem:[%s0 + $0x58] sm:$0xff]
  %v28 = vld [vmem:[%s0 + $0x60] sm:$0xff]
  %v29 = vld [vmem:[%s0 + $0x68] sm:$0xff]
  %v30 = vld [vmem:[%s0 + $0x70] sm:$0xff]
  %v31 = vld [vmem:[%s0 + $0x78] sm:$0xff]
  %v32 = vld [vmem:[%s0 + $0x80] sm:$0xff]
  %v33 = vld [vmem:[%s0 + $0x88] sm:$0xff]
  %v34 = vld [vmem:[%s0 + $0x90] sm:$0x33]
  %v35 = vld [vmem:[%s0 + $0x98] sm:$0x33]
  %v56 = vunpack.c.l.b16 %v16
  %v57 = vunpack.c.h.b16 %v16
  %v58 = vunpack.c.l.b16 %v17
  %v59 = vunpack.c.h.b16 %v17
  %v60 = vunpack.c.l.b16 %v18
  %v61 = vunpack.c.h.b16 %v18
  %v62 = vunpack.c.l.b16 %v19
  %v63 = vunpack.c.h.b16 %v19
  %v64 = vunpack.c.l.b16 %v20
  %v65 = vunpack.c.h.b16 %v20
  %v66 = vunpack.c.l.b16 %v21
  %v67 = vunpack.c.h.b16 %v21
  %v68 = vunpack.c.l.b16 %v22
  %v69 = vunpack.c.h.b16 %v22
  %v70 = vunpack.c.l.b16 %v23
  %v71 = vunpack.c.h.b16 %v23
  %v72 = vunpack.c.l.b16 %v24
  %v73 = vunpack.c.h.b16 %v24
  %v74 = vunpack.c.l.b16 %v25
  %v75 = vunpack.c.h.b16 %v25
  %v76 = vunpack.c.l.b16 %v26
  %v77 = vunpack.c.h.b16 %v26
  %v78 = vunpack.c.l.b16 %v27
  %v79 = vunpack.c.h.b16 %v27
  %v80 = vunpack.c.l.b16 %v28
  %v81 = vunpack.c.h.b16 %v28
  %v82 = vunpack.c.l.b16 %v29
  %v83 = vunpack.c.h.b16 %v29
  %v84 = vunpack.c.l.b16 %v30
  %v85 = vunpack.c.h.b16 %v30
  %v86 = vunpack.c.l.b16 %v31
  %v87 = vunpack.c.h.b16 %v31
  %v88 = vunpack.c.l.b16 %v32
  %v89 = vunpack.c.h.b16 %v32
  %v90 = vunpack.c.l.b16 %v33
  %v91 = vunpack.c.h.b16 %v33
  %v92 = vunpack.c.l.b16 %v34
  %v93 = vunpack.c.h.b16 %v34
  %v94 = vunpack.c.l.b16 %v35
  %v95 = vunpack.c.h.b16 %v35
  %v96 = vpack.c.b16 %v60, %v56
  %v97 = vpack.c.b16 %v61, %v57
  %v98 = vpack.c.b16 %v62, %v58
  %v99 = vpack.c.b16 %v63, %v59
  %v100 = vpack.c.b16 %v68, %v64
  %v101 = vpack.c.b16 %v69, %v65
  %v102 = vpack.c.b16 %v70, %v66
  %v103 = vpack.c.b16 %v71, %v67
  %v104 = vpack.c.b16 %v76, %v72
  %v105 = vpack.c.b16 %v77, %v73
  %v106 = vpack.c.b16 %v78, %v74
  %v107 = vpack.c.b16 %v79, %v75
  %v108 = vpack.c.b16 %v84, %v80
  %v109 = vpack.c.b16 %v85, %v81
  %v110 = vpack.c.b16 %v86, %v82
  %v111 = vpack.c.b16 %v87, %v83
  %v112 = vpack.c.b16 %v92, %v88
  %v113 = vpack.c.b16 %v93, %v89
  %v114 = vpack.c.b16 %v94, %v90
  %v115 = vpack.c.b16 %v95, %v91
  %vm132 = vcmask 613376
  %v134 = vsel %vm132, %v15, 0
  %vm136 = vcmask 1044480
  %vm137 = vcmask 1045504
  %v138 = vsel %vm136, 4294967295, 65535
  %v139 = vsel %vm137, %v138, 0
  %v141 = vand.u32 %v112, %v139
  %v144 = vand.u32 %v113, %v139
  %v147 = vand.u32 %v114, %v139
  %v150 = vand.u32 %v115, %v139
  %152 = vmatprep.subr.bf16.mxu0 %v97
  %153 = vmatpush1.bf16.msra.mxu0 %v96
  %154 = vmatprep.subr.bf16.mxu0 %v101
  %155 = vmatpush1.bf16.msra.mxu0 %v100
  %156 = vmatprep.subr.bf16.mxu0 %v105
  %157 = vmatpush1.bf16.msra.mxu0 %v104
  %158 = vmatprep.subr.bf16.mxu0 %v109
  %159 = vmatpush1.bf16.msra.mxu0 %v108
  %160 = vmatprep.subr.bf16.mxu0 %v144
  %161 = vmatpush1.bf16.msra.mxu0 %v141
  %162 = vmatprep.subr.bf16.mxu0 0
  %163 = vmatpush1.bf16.msra.mxu0 0
  %164 = vmatprep.subr.bf16.mxu0 0
  %165 = vmatpush1.bf16.msra.mxu0 0
  %166 = vmatprep.subr.bf16.mxu0 0
  %167 = vmatpush1.bf16.msra.mxu0 0
  %168 = vmatprep.subr.bf16.mxu0 0
  %169 = vmatpush1.bf16.msra.mxu0 0
  %170 = vmatprep.subr.bf16.mxu0 0
  %171 = vmatpush1.bf16.msra.mxu0 0
  %172 = vmatprep.subr.bf16.mxu0 0
  %173 = vmatpush1.bf16.msra.mxu0 0
  %174 = vmatprep.subr.bf16.mxu0 0
  %175 = vmatpush1.bf16.msra.mxu0 0
  %176 = vmatprep.subr.bf16.mxu0 0
  %177 = vmatpush1.bf16.msra.mxu0 0
  %178 = vmatprep.subr.bf16.mxu0 0
  %179 = vmatpush1.bf16.msra.mxu0 0
  %180 = vmatprep.subr.bf16.mxu0 0
  %181 = vmatpush1.bf16.msra.mxu0 0
  %182 = vmatprep.subr.bf16.mxu0 0
  %183 = vmatpush1.bf16.msra.mxu0 0
  %184 = vmatprep.mubr.bf16.mxu0 0
  %185 = vmatmul.mubr.bf16.gmra.mrb[0].mxu0 %v134
  %v186 = vpop.f32.mrb[0].mxu0
  %v187 = vadd.f32 0.0, %v186
  %v188 = vpop.f32.mrb[0].mxu0
  %v189 = vadd.f32 0.0, %v188
  %v190 = vpop.f32.mrb[0].mxu0
  %v191 = vpop.f32.mrb[0].mxu0
  %192 = vdwg.mxu0
  %193 = vmatprep.subr.bf16.mxu0 %v99
  %194 = vmatpush1.bf16.msra.mxu0 %v98
  %195 = vmatprep.subr.bf16.mxu0 %v103
  %196 = vmatpush1.bf16.msra.mxu0 %v102
  %197 = vmatprep.subr.bf16.mxu0 %v107
  %198 = vmatpush1.bf16.msra.mxu0 %v106
  %199 = vmatprep.subr.bf16.mxu0 %v111
  %200 = vmatpush1.bf16.msra.mxu0 %v110
  %201 = vmatprep.subr.bf16.mxu0 %v150
  %202 = vmatpush1.bf16.msra.mxu0 %v147
  %203 = vmatprep.subr.bf16.mxu0 0
  %204 = vmatpush1.bf16.msra.mxu0 0
  %205 = vmatprep.subr.bf16.mxu0 0
  %206 = vmatpush1.bf16.msra.mxu0 0
  %207 = vmatprep.subr.bf16.mxu0 0
  %208 = vmatpush1.bf16.msra.mxu0 0
  %209 = vmatprep.subr.bf16.mxu0 0
  %210 = vmatpush1.bf16.msra.mxu0 0
  %211 = vmatprep.subr.bf16.mxu0 0
  %212 = vmatpush1.bf16.msra.mxu0 0
  %213 = vmatprep.subr.bf16.mxu0 0
  %214 = vmatpush1.bf16.msra.mxu0 0
  %215 = vmatprep.subr.bf16.mxu0 0
  %216 = vmatpush1.bf16.msra.mxu0 0
  %217 = vmatprep.subr.bf16.mxu0 0
  %218 = vmatpush1.bf16.msra.mxu0 0
  %219 = vmatprep.subr.bf16.mxu0 0
  %220 = vmatpush1.bf16.msra.mxu0 0
  %221 = vmatprep.subr.bf16.mxu0 0
  %222 = vmatpush1.bf16.msra.mxu0 0
  %223 = vmatprep.subr.bf16.mxu0 0
  %224 = vmatpush1.bf16.msra.mxu0 0
  %225 = vmatprep.mubr.bf16.mxu0 0
  %226 = vmatmul.mubr.bf16.gmra.mrb[0].mxu0 %v134
  %v227 = vpop.f32.mrb[0].mxu0
  %v228 = vadd.f32 0.0, %v227
  %v229 = vpop.f32.mrb[0].mxu0
  %v230 = vadd.f32 0.0, %v229
  %v231 = vpop.f32.mrb[0].mxu0
  %v232 = vpop.f32.mrb[0].mxu0
  %233 = vdwg.mxu0
  %s234 = scalar_lea.vmem %s0, 160
  %v235 = vld [vmem:[%s234] sm:$0xff]
  %v236 = vld [vmem:[%s234 + $0x8] sm:$0xff]
  %v237 = vld [vmem:[%s234 + $0x10] sm:$0xff]
  %v238 = vld [vmem:[%s234 + $0x18] sm:$0xff]
  %v239 = vld [vmem:[%s234 + $0x20] sm:$0xff]
  %v240 = vld [vmem:[%s234 + $0x28] sm:$0xff]
  %v241 = vld [vmem:[%s234 + $0x30] sm:$0xff]
  %v242 = vld [vmem:[%s234 + $0x38] sm:$0xff]
  %v243 = vld [vmem:[%s234 + $0x40] sm:$0xff]
  %v244 = vld [vmem:[%s234 + $0x48] sm:$0xff]
  %v245 = vld [vmem:[%s234 + $0x50] sm:$0xff]
  %v246 = vld [vmem:[%s234 + $0x58] sm:$0xff]
  %v247 = vld [vmem:[%s234 + $0x60] sm:$0xff]
  %v248 = vld [vmem:[%s234 + $0x68] sm:$0xff]
  %v249 = vld [vmem:[%s234 + $0x70] sm:$0xff]
  %v250 = vld [vmem:[%s234 + $0x78] sm:$0xff]
  %v251 = vld [vmem:[%s234 + $0x80] sm:$0xff]
  %v252 = vld [vmem:[%s234 + $0x88] sm:$0xff]
  %v253 = vld [vmem:[%s234 + $0x90] sm:$0x33]
  %v254 = vld [vmem:[%s234 + $0x98] sm:$0x33]
  %v275 = vunpack.c.l.b16 %v235
  %v276 = vunpack.c.h.b16 %v235
  %v277 = vunpack.c.l.b16 %v236
  %v278 = vunpack.c.h.b16 %v236
  %v279 = vunpack.c.l.b16 %v237
  %v280 = vunpack.c.h.b16 %v237
  %v281 = vunpack.c.l.b16 %v238
  %v282 = vunpack.c.h.b16 %v238
  %v283 = vunpack.c.l.b16 %v239
  %v284 = vunpack.c.h.b16 %v239
  %v285 = vunpack.c.l.b16 %v240
  %v286 = vunpack.c.h.b16 %v240
  %v287 = vunpack.c.l.b16 %v241
  %v288 = vunpack.c.h.b16 %v241
  %v289 = vunpack.c.l.b16 %v242
  %v290 = vunpack.c.h.b16 %v242
  %v291 = vunpack.c.l.b16 %v243
  %v292 = vunpack.c.h.b16 %v243
  %v293 = vunpack.c.l.b16 %v244
  %v294 = vunpack.c.h.b16 %v244
  %v295 = vunpack.c.l.b16 %v245
  %v296 = vunpack.c.h.b16 %v245
  %v297 = vunpack.c.l.b16 %v246
  %v298 = vunpack.c.h.b16 %v246
  %v299 = vunpack.c.l.b16 %v247
  %v300 = vunpack.c.h.b16 %v247
  %v301 = vunpack.c.l.b16 %v248
  %v302 = vunpack.c.h.b16 %v248
  %v303 = vunpack.c.l.b16 %v249
  %v304 = vunpack.c.h.b16 %v249
  %v305 = vunpack.c.l.b16 %v250
  %v306 = vunpack.c.h.b16 %v250
  %v307 = vunpack.c.l.b16 %v251
  %v308 = vunpack.c.h.b16 %v251
  %v309 = vunpack.c.l.b16 %v252
  %v310 = vunpack.c.h.b16 %v252
  %v311 = vunpack.c.l.b16 %v253
  %v312 = vunpack.c.h.b16 %v253
  %v313 = vunpack.c.l.b16 %v254
  %v314 = vunpack.c.h.b16 %v254
  %v315 = vpack.c.b16 %v279, %v275
  %v316 = vpack.c.b16 %v280, %v276
  %v317 = vpack.c.b16 %v281, %v277
  %v318 = vpack.c.b16 %v282, %v278
  %v319 = vpack.c.b16 %v287, %v283
  %v320 = vpack.c.b16 %v288, %v284
  %v321 = vpack.c.b16 %v289, %v285
  %v322 = vpack.c.b16 %v290, %v286
  %v323 = vpack.c.b16 %v295, %v291
  %v324 = vpack.c.b16 %v296, %v292
  %v325 = vpack.c.b16 %v297, %v293
  %v326 = vpack.c.b16 %v298, %v294
  %v327 = vpack.c.b16 %v303, %v299
  %v328 = vpack.c.b16 %v304, %v300
  %v329 = vpack.c.b16 %v305, %v301
  %v330 = vpack.c.b16 %v306, %v302
  %v331 = vpack.c.b16 %v311, %v307
  %v332 = vpack.c.b16 %v312, %v308
  %v333 = vpack.c.b16 %v313, %v309
  %v334 = vpack.c.b16 %v314, %v310
  %v352 = vand.u32 %v331, %v139
  %v355 = vand.u32 %v332, %v139
  %v358 = vand.u32 %v333, %v139
  %v361 = vand.u32 %v334, %v139
  %363 = vmatprep.subr.bf16.mxu0 %v316
  %364 = vmatpush1.bf16.msra.mxu0 %v315
  %365 = vmatprep.subr.bf16.mxu0 %v320
  %366 = vmatpush1.bf16.msra.mxu0 %v319
  %367 = vmatprep.subr.bf16.mxu0 %v324
  %368 = vmatpush1.bf16.msra.mxu0 %v323
  %369 = vmatprep.subr.bf16.mxu0 %v328
  %370 = vmatpush1.bf16.msra.mxu0 %v327
  %371 = vmatprep.subr.bf16.mxu0 %v355
  %372 = vmatpush1.bf16.msra.mxu0 %v352
  %373 = vmatprep.subr.bf16.mxu0 0
  %374 = vmatpush1.bf16.msra.mxu0 0
  %375 = vmatprep.subr.bf16.mxu0 0
  %376 = vmatpush1.bf16.msra.mxu0 0
  %377 = vmatprep.subr.bf16.mxu0 0
  %378 = vmatpush1.bf16.msra.mxu0 0
  %379 = vmatprep.subr.bf16.mxu0 0
  %380 = vmatpush1.bf16.msra.mxu0 0
  %381 = vmatprep.subr.bf16.mxu0 0
  %382 = vmatpush1.bf16.msra.mxu0 0
  %383 = vmatprep.subr.bf16.mxu0 0
  %384 = vmatpush1.bf16.msra.mxu0 0
  %385 = vmatprep.subr.bf16.mxu0 0
  %386 = vmatpush1.bf16.msra.mxu0 0
  %387 = vmatprep.subr.bf16.mxu0 0
  %388 = vmatpush1.bf16.msra.mxu0 0
  %389 = vmatprep.subr.bf16.mxu0 0
  %390 = vmatpush1.bf16.msra.mxu0 0
  %391 = vmatprep.subr.bf16.mxu0 0
  %392 = vmatpush1.bf16.msra.mxu0 0
  %393 = vmatprep.subr.bf16.mxu0 0
  %394 = vmatpush1.bf16.msra.mxu0 0
  %395 = vmatprep.mubr.bf16.mxu0 0
  %396 = vmatmul.mubr.bf16.gmra.mrb[0].mxu0 %v134
  %v397 = vpop.f32.mrb[0].mxu0
  %v398 = vadd.f32 0.0, %v397
  %v399 = vpop.f32.mrb[0].mxu0
  %v400 = vadd.f32 0.0, %v399
  %v401 = vpop.f32.mrb[0].mxu0
  %v402 = vpop.f32.mrb[0].mxu0
  %403 = vdwg.mxu0
  %404 = vmatprep.subr.bf16.mxu0 %v318
  %405 = vmatpush1.bf16.msra.mxu0 %v317
  %406 = vmatprep.subr.bf16.mxu0 %v322
  %407 = vmatpush1.bf16.msra.mxu0 %v321
  %408 = vmatprep.subr.bf16.mxu0 %v326
  %409 = vmatpush1.bf16.msra.mxu0 %v325
  %410 = vmatprep.subr.bf16.mxu0 %v330
  %411 = vmatpush1.bf16.msra.mxu0 %v329
  %412 = vmatprep.subr.bf16.mxu0 %v361
  %413 = vmatpush1.bf16.msra.mxu0 %v358
  %414 = vmatprep.subr.bf16.mxu0 0
  %415 = vmatpush1.bf16.msra.mxu0 0
  %416 = vmatprep.subr.bf16.mxu0 0
  %417 = vmatpush1.bf16.msra.mxu0 0
  %418 = vmatprep.subr.bf16.mxu0 0
  %419 = vmatpush1.bf16.msra.mxu0 0
  %420 = vmatprep.subr.bf16.mxu0 0
  %421 = vmatpush1.bf16.msra.mxu0 0
  %422 = vmatprep.subr.bf16.mxu0 0
  %423 = vmatpush1.bf16.msra.mxu0 0
  %424 = vmatprep.subr.bf16.mxu0 0
  %425 = vmatpush1.bf16.msra.mxu0 0
  %426 = vmatprep.subr.bf16.mxu0 0
  %427 = vmatpush1.bf16.msra.mxu0 0
  %428 = vmatprep.subr.bf16.mxu0 0
  %429 = vmatpush1.bf16.msra.mxu0 0
  %430 = vmatprep.subr.bf16.mxu0 0
  %431 = vmatpush1.bf16.msra.mxu0 0
  %432 = vmatprep.subr.bf16.mxu0 0
  %433 = vmatpush1.bf16.msra.mxu0 0
  %434 = vmatprep.subr.bf16.mxu0 0
  %435 = vmatpush1.bf16.msra.mxu0 0
  %436 = vmatprep.mubr.bf16.mxu0 0
  %437 = vmatmul.mubr.bf16.gmra.mrb[0].mxu0 %v134
  %v438 = vpop.f32.mrb[0].mxu0
  %v439 = vadd.f32 0.0, %v438
  %v440 = vpop.f32.mrb[0].mxu0
  %v441 = vadd.f32 0.0, %v440
  %v442 = vpop.f32.mrb[0].mxu0
  %v443 = vpop.f32.mrb[0].mxu0
  %444 = vdwg.mxu0
  %v445 = vmax.f32 %v187, %v398
  %v446 = vmax.f32 %v189, %v400
  %v447 = vmax.f32 %v228, %v439
  %v448 = vmax.f32 %v230, %v441
  %s449 = scalar_lea.vmem %s0, 320
  %v450 = vld [vmem:[%s449] sm:$0xff]
  %v451 = vld [vmem:[%s449 + $0x8] sm:$0xff]
  %v452 = vld [vmem:[%s449 + $0x10] sm:$0xff]
  %v453 = vld [vmem:[%s449 + $0x18] sm:$0xff]
  %v454 = vld [vmem:[%s449 + $0x20] sm:$0xff]
  %v455 = vld [vmem:[%s449 + $0x28] sm:$0xff]
  %v456 = vld [vmem:[%s449 + $0x30] sm:$0xff]
  %v457 = vld [vmem:[%s449 + $0x38] sm:$0xff]
  %v458 = vld [vmem:[%s449 + $0x40] sm:$0xff]
  %v459 = vld [vmem:[%s449 + $0x48] sm:$0xff]
  %v460 = vld [vmem:[%s449 + $0x50] sm:$0xff]
  %v461 = vld [vmem:[%s449 + $0x58] sm:$0xff]
  %v462 = vld [vmem:[%s449 + $0x60] sm:$0xff]
  %v463 = vld [vmem:[%s449 + $0x68] sm:$0xff]
  %v464 = vld [vmem:[%s449 + $0x70] sm:$0xff]
  %v465 = vld [vmem:[%s449 + $0x78] sm:$0xff]
  %v466 = vld [vmem:[%s449 + $0x80] sm:$0xff]
  %v467 = vld [vmem:[%s449 + $0x88] sm:$0xff]
  %v468 = vld [vmem:[%s449 + $0x90] sm:$0x33]
  %v469 = vld [vmem:[%s449 + $0x98] sm:$0x33]
  %v490 = vunpack.c.l.b16 %v450
  %v491 = vunpack.c.h.b16 %v450
  %v492 = vunpack.c.l.b16 %v451
  %v493 = vunpack.c.h.b16 %v451
  %v494 = vunpack.c.l.b16 %v452
  %v495 = vunpack.c.h.b16 %v452
  %v496 = vunpack.c.l.b16 %v453
  %v497 = vunpack.c.h.b16 %v453
  %v498 = vunpack.c.l.b16 %v454
  %v499 = vunpack.c.h.b16 %v454
  %v500 = vunpack.c.l.b16 %v455
  %v501 = vunpack.c.h.b16 %v455
  %v502 = vunpack.c.l.b16 %v456
  %v503 = vunpack.c.h.b16 %v456
  %v504 = vunpack.c.l.b16 %v457
  %v505 = vunpack.c.h.b16 %v457
  %v506 = vunpack.c.l.b16 %v458
  %v507 = vunpack.c.h.b16 %v458
  %v508 = vunpack.c.l.b16 %v459
  %v509 = vunpack.c.h.b16 %v459
  %v510 = vunpack.c.l.b16 %v460
  %v511 = vunpack.c.h.b16 %v460
  %v512 = vunpack.c.l.b16 %v461
  %v513 = vunpack.c.h.b16 %v461
  %v514 = vunpack.c.l.b16 %v462
  %v515 = vunpack.c.h.b16 %v462
  %v516 = vunpack.c.l.b16 %v463
  %v517 = vunpack.c.h.b16 %v463
  %v518 = vunpack.c.l.b16 %v464
  %v519 = vunpack.c.h.b16 %v464
  %v520 = vunpack.c.l.b16 %v465
  %v521 = vunpack.c.h.b16 %v465
  %v522 = vunpack.c.l.b16 %v466
  %v523 = vunpack.c.h.b16 %v466
  %v524 = vunpack.c.l.b16 %v467
  %v525 = vunpack.c.h.b16 %v467
  %v526 = vunpack.c.l.b16 %v468
  %v527 = vunpack.c.h.b16 %v468
  %v528 = vunpack.c.l.b16 %v469
  %v529 = vunpack.c.h.b16 %v469
  %v530 = vpack.c.b16 %v494, %v490
  %v531 = vpack.c.b16 %v495, %v491
  %v532 = vpack.c.b16 %v496, %v492
  %v533 = vpack.c.b16 %v497, %v493
  %v534 = vpack.c.b16 %v502, %v498
  %v535 = vpack.c.b16 %v503, %v499
  %v536 = vpack.c.b16 %v504, %v500
  %v537 = vpack.c.b16 %v505, %v501
  %v538 = vpack.c.b16 %v510, %v506
  %v539 = vpack.c.b16 %v511, %v507
  %v540 = vpack.c.b16 %v512, %v508
  %v541 = vpack.c.b16 %v513, %v509
  %v542 = vpack.c.b16 %v518, %v514
  %v543 = vpack.c.b16 %v519, %v515
  %v544 = vpack.c.b16 %v520, %v516
  %v545 = vpack.c.b16 %v521, %v517
  %v546 = vpack.c.b16 %v526, %v522
  %v547 = vpack.c.b16 %v527, %v523
  %v548 = vpack.c.b16 %v528, %v524
  %v549 = vpack.c.b16 %v529, %v525
  %v567 = vand.u32 %v546, %v139
  %v570 = vand.u32 %v547, %v139
  %v573 = vand.u32 %v548, %v139
  %v576 = vand.u32 %v549, %v139
  %578 = vmatprep.subr.bf16.mxu0 %v531
  %579 = vmatpush1.bf16.msra.mxu0 %v530
  %580 = vmatprep.subr.bf16.mxu0 %v535
  %581 = vmatpush1.bf16.msra.mxu0 %v534
  %582 = vmatprep.subr.bf16.mxu0 %v539
  %583 = vmatpush1.bf16.msra.mxu0 %v538
  %584 = vmatprep.subr.bf16.mxu0 %v543
  %585 = vmatpush1.bf16.msra.mxu0 %v542
  %586 = vmatprep.subr.bf16.mxu0 %v570
  %587 = vmatpush1.bf16.msra.mxu0 %v567
  %588 = vmatprep.subr.bf16.mxu0 0
  %589 = vmatpush1.bf16.msra.mxu0 0
  %590 = vmatprep.subr.bf16.mxu0 0
  %591 = vmatpush1.bf16.msra.mxu0 0
  %592 = vmatprep.subr.bf16.mxu0 0
  %593 = vmatpush1.bf16.msra.mxu0 0
  %594 = vmatprep.subr.bf16.mxu0 0
  %595 = vmatpush1.bf16.msra.mxu0 0
  %596 = vmatprep.subr.bf16.mxu0 0
  %597 = vmatpush1.bf16.msra.mxu0 0
  %598 = vmatprep.subr.bf16.mxu0 0
  %599 = vmatpush1.bf16.msra.mxu0 0
  %600 = vmatprep.subr.bf16.mxu0 0
  %601 = vmatpush1.bf16.msra.mxu0 0
  %602 = vmatprep.subr.bf16.mxu0 0
  %603 = vmatpush1.bf16.msra.mxu0 0
  %604 = vmatprep.subr.bf16.mxu0 0
  %605 = vmatpush1.bf16.msra.mxu0 0
  %606 = vmatprep.subr.bf16.mxu0 0
  %607 = vmatpush1.bf16.msra.mxu0 0
  %608 = vmatprep.subr.bf16.mxu0 0
  %609 = vmatpush1.bf16.msra.mxu0 0
  %610 = vmatprep.mubr.bf16.mxu0 0
  %611 = vmatmul.mubr.bf16.gmra.mrb[0].mxu0 %v134
  %v612 = vpop.f32.mrb[0].mxu0
  %v613 = vadd.f32 0.0, %v612
  %v614 = vpop.f32.mrb[0].mxu0
  %v615 = vadd.f32 0.0, %v614
  %v616 = vpop.f32.mrb[0].mxu0
  %v617 = vpop.f32.mrb[0].mxu0
  %618 = vdwg.mxu0
  %619 = vmatprep.subr.bf16.mxu0 %v533
  %620 = vmatpush1.bf16.msra.mxu0 %v532
  %621 = vmatprep.subr.bf16.mxu0 %v537
  %622 = vmatpush1.bf16.msra.mxu0 %v536
  %623 = vmatprep.subr.bf16.mxu0 %v541
  %624 = vmatpush1.bf16.msra.mxu0 %v540
  %625 = vmatprep.subr.bf16.mxu0 %v545
  %626 = vmatpush1.bf16.msra.mxu0 %v544
  %627 = vmatprep.subr.bf16.mxu0 %v576
  %628 = vmatpush1.bf16.msra.mxu0 %v573
  %629 = vmatprep.subr.bf16.mxu0 0
  %630 = vmatpush1.bf16.msra.mxu0 0
  %631 = vmatprep.subr.bf16.mxu0 0
  %632 = vmatpush1.bf16.msra.mxu0 0
  %633 = vmatprep.subr.bf16.mxu0 0
  %634 = vmatpush1.bf16.msra.mxu0 0
  %635 = vmatprep.subr.bf16.mxu0 0
  %636 = vmatpush1.bf16.msra.mxu0 0
  %637 = vmatprep.subr.bf16.mxu0 0
  %638 = vmatpush1.bf16.msra.mxu0 0
  %639 = vmatprep.subr.bf16.mxu0 0
  %640 = vmatpush1.bf16.msra.mxu0 0
  %641 = vmatprep.subr.bf16.mxu0 0
  %642 = vmatpush1.bf16.msra.mxu0 0
  %643 = vmatprep.subr.bf16.mxu0 0
  %644 = vmatpush1.bf16.msra.mxu0 0
  %645 = vmatprep.subr.bf16.mxu0 0
  %646 = vmatpush1.bf16.msra.mxu0 0
  %647 = vmatprep.subr.bf16.mxu0 0
  %648 = vmatpush1.bf16.msra.mxu0 0
  %649 = vmatprep.subr.bf16.mxu0 0
  %650 = vmatpush1.bf16.msra.mxu0 0
  %651 = vmatprep.mubr.bf16.mxu0 0
  %652 = vmatmul.mubr.bf16.gmra.mrb[0].mxu0 %v134
  %v653 = vpop.f32.mrb[0].mxu0
  %v654 = vadd.f32 0.0, %v653
  %v655 = vpop.f32.mrb[0].mxu0
  %v656 = vadd.f32 0.0, %v655
  %v657 = vpop.f32.mrb[0].mxu0
  %v658 = vpop.f32.mrb[0].mxu0
  %659 = vdwg.mxu0
  %v660 = vmax.f32 %v445, %v613
  %v661 = vmax.f32 %v446, %v615
  %v662 = vmax.f32 %v447, %v654
  %v663 = vmax.f32 %v448, %v656
  %s664 = scalar_lea.vmem %s0, 480
  %v665 = vld [vmem:[%s664] sm:$0xff]
  %v666 = vld [vmem:[%s664 + $0x8] sm:$0xff]
  %v667 = vld [vmem:[%s664 + $0x10] sm:$0xff]
  %v668 = vld [vmem:[%s664 + $0x18] sm:$0xff]
  %v669 = vld [vmem:[%s664 + $0x20] sm:$0xff]
  %v670 = vld [vmem:[%s664 + $0x28] sm:$0xff]
  %v671 = vld [vmem:[%s664 + $0x30] sm:$0xff]
  %v672 = vld [vmem:[%s664 + $0x38] sm:$0xff]
  %v673 = vld [vmem:[%s664 + $0x40] sm:$0xff]
  %v674 = vld [vmem:[%s664 + $0x48] sm:$0xff]
  %v675 = vld [vmem:[%s664 + $0x50] sm:$0xff]
  %v676 = vld [vmem:[%s664 + $0x58] sm:$0xff]
  %v677 = vld [vmem:[%s664 + $0x60] sm:$0xff]
  %v678 = vld [vmem:[%s664 + $0x68] sm:$0xff]
  %v679 = vld [vmem:[%s664 + $0x70] sm:$0xff]
  %v680 = vld [vmem:[%s664 + $0x78] sm:$0xff]
  %v681 = vld [vmem:[%s664 + $0x80] sm:$0xff]
  %v682 = vld [vmem:[%s664 + $0x88] sm:$0xff]
  %v683 = vld [vmem:[%s664 + $0x90] sm:$0x33]
  %v684 = vld [vmem:[%s664 + $0x98] sm:$0x33]
  %v705 = vunpack.c.l.b16 %v665
  %v706 = vunpack.c.h.b16 %v665
  %v707 = vunpack.c.l.b16 %v666
  %v708 = vunpack.c.h.b16 %v666
  %v709 = vunpack.c.l.b16 %v667
  %v710 = vunpack.c.h.b16 %v667
  %v711 = vunpack.c.l.b16 %v668
  %v712 = vunpack.c.h.b16 %v668
  %v713 = vunpack.c.l.b16 %v669
  %v714 = vunpack.c.h.b16 %v669
  %v715 = vunpack.c.l.b16 %v670
  %v716 = vunpack.c.h.b16 %v670
  %v717 = vunpack.c.l.b16 %v671
  %v718 = vunpack.c.h.b16 %v671
  %v719 = vunpack.c.l.b16 %v672
  %v720 = vunpack.c.h.b16 %v672
  %v721 = vunpack.c.l.b16 %v673
  %v722 = vunpack.c.h.b16 %v673
  %v723 = vunpack.c.l.b16 %v674
  %v724 = vunpack.c.h.b16 %v674
  %v725 = vunpack.c.l.b16 %v675
  %v726 = vunpack.c.h.b16 %v675
  %v727 = vunpack.c.l.b16 %v676
  %v728 = vunpack.c.h.b16 %v676
  %v729 = vunpack.c.l.b16 %v677
  %v730 = vunpack.c.h.b16 %v677
  %v731 = vunpack.c.l.b16 %v678
  %v732 = vunpack.c.h.b16 %v678
  %v733 = vunpack.c.l.b16 %v679
  %v734 = vunpack.c.h.b16 %v679
  %v735 = vunpack.c.l.b16 %v680
  %v736 = vunpack.c.h.b16 %v680
  %v737 = vunpack.c.l.b16 %v681
  %v738 = vunpack.c.h.b16 %v681
  %v739 = vunpack.c.l.b16 %v682
  %v740 = vunpack.c.h.b16 %v682
  %v741 = vunpack.c.l.b16 %v683
  %v742 = vunpack.c.h.b16 %v683
  %v743 = vunpack.c.l.b16 %v684
  %v744 = vunpack.c.h.b16 %v684
  %v745 = vpack.c.b16 %v709, %v705
  %v746 = vpack.c.b16 %v710, %v706
  %v747 = vpack.c.b16 %v711, %v707
  %v748 = vpack.c.b16 %v712, %v708
  %v749 = vpack.c.b16 %v717, %v713
  %v750 = vpack.c.b16 %v718, %v714
  %v751 = vpack.c.b16 %v719, %v715
  %v752 = vpack.c.b16 %v720, %v716
  %v753 = vpack.c.b16 %v725, %v721
  %v754 = vpack.c.b16 %v726, %v722
  %v755 = vpack.c.b16 %v727, %v723
  %v756 = vpack.c.b16 %v728, %v724
  %v757 = vpack.c.b16 %v733, %v729
  %v758 = vpack.c.b16 %v734, %v730
  %v759 = vpack.c.b16 %v735, %v731
  %v760 = vpack.c.b16 %v736, %v732
  %v761 = vpack.c.b16 %v741, %v737
  %v762 = vpack.c.b16 %v742, %v738
  %v763 = vpack.c.b16 %v743, %v739
  %v764 = vpack.c.b16 %v744, %v740
  %v782 = vand.u32 %v761, %v139
  %v785 = vand.u32 %v762, %v139
  %v788 = vand.u32 %v763, %v139
  %v791 = vand.u32 %v764, %v139
  %793 = vmatprep.subr.bf16.mxu0 %v746
  %794 = vmatpush1.bf16.msra.mxu0 %v745
  %795 = vmatprep.subr.bf16.mxu0 %v750
  %796 = vmatpush1.bf16.msra.mxu0 %v749
  %797 = vmatprep.subr.bf16.mxu0 %v754
  %798 = vmatpush1.bf16.msra.mxu0 %v753
  %799 = vmatprep.subr.bf16.mxu0 %v758
  %800 = vmatpush1.bf16.msra.mxu0 %v757
  %801 = vmatprep.subr.bf16.mxu0 %v785
  %802 = vmatpush1.bf16.msra.mxu0 %v782
  %803 = vmatprep.subr.bf16.mxu0 0
  %804 = vmatpush1.bf16.msra.mxu0 0
  %805 = vmatprep.subr.bf16.mxu0 0
  %806 = vmatpush1.bf16.msra.mxu0 0
  %807 = vmatprep.subr.bf16.mxu0 0
  %808 = vmatpush1.bf16.msra.mxu0 0
  %809 = vmatprep.subr.bf16.mxu0 0
  %810 = vmatpush1.bf16.msra.mxu0 0
  %811 = vmatprep.subr.bf16.mxu0 0
  %812 = vmatpush1.bf16.msra.mxu0 0
  %813 = vmatprep.subr.bf16.mxu0 0
  %814 = vmatpush1.bf16.msra.mxu0 0
  %815 = vmatprep.subr.bf16.mxu0 0
  %816 = vmatpush1.bf16.msra.mxu0 0
  %817 = vmatprep.subr.bf16.mxu0 0
  %818 = vmatpush1.bf16.msra.mxu0 0
  %819 = vmatprep.subr.bf16.mxu0 0
  %820 = vmatpush1.bf16.msra.mxu0 0
  %821 = vmatprep.subr.bf16.mxu0 0
  %822 = vmatpush1.bf16.msra.mxu0 0
  %823 = vmatprep.subr.bf16.mxu0 0
  %824 = vmatpush1.bf16.msra.mxu0 0
  %825 = vmatprep.mubr.bf16.mxu0 0
  %826 = vmatmul.mubr.bf16.gmra.mrb[0].mxu0 %v134
  %v827 = vpop.f32.mrb[0].mxu0
  %v828 = vadd.f32 0.0, %v827
  %v829 = vpop.f32.mrb[0].mxu0
  %v830 = vadd.f32 0.0, %v829
  %v831 = vpop.f32.mrb[0].mxu0
  %v832 = vpop.f32.mrb[0].mxu0
  %833 = vdwg.mxu0
  %834 = vmatprep.subr.bf16.mxu0 %v748
  %835 = vmatpush1.bf16.msra.mxu0 %v747
  %836 = vmatprep.subr.bf16.mxu0 %v752
  %837 = vmatpush1.bf16.msra.mxu0 %v751
  %838 = vmatprep.subr.bf16.mxu0 %v756
  %839 = vmatpush1.bf16.msra.mxu0 %v755
  %840 = vmatprep.subr.bf16.mxu0 %v760
  %841 = vmatpush1.bf16.msra.mxu0 %v759
  %842 = vmatprep.subr.bf16.mxu0 %v791
  %843 = vmatpush1.bf16.msra.mxu0 %v788
  %844 = vmatprep.subr.bf16.mxu0 0
  %845 = vmatpush1.bf16.msra.mxu0 0
  %846 = vmatprep.subr.bf16.mxu0 0
  %847 = vmatpush1.bf16.msra.mxu0 0
  %848 = vmatprep.subr.bf16.mxu0 0
  %849 = vmatpush1.bf16.msra.mxu0 0
  %850 = vmatprep.subr.bf16.mxu0 0
  %851 = vmatpush1.bf16.msra.mxu0 0
  %852 = vmatprep.subr.bf16.mxu0 0
  %853 = vmatpush1.bf16.msra.mxu0 0
  %854 = vmatprep.subr.bf16.mxu0 0
  %855 = vmatpush1.bf16.msra.mxu0 0
  %856 = vmatprep.subr.bf16.mxu0 0
  %857 = vmatpush1.bf16.msra.mxu0 0
  %858 = vmatprep.subr.bf16.mxu0 0
  %859 = vmatpush1.bf16.msra.mxu0 0
  %860 = vmatprep.subr.bf16.mxu0 0
  %861 = vmatpush1.bf16.msra.mxu0 0
  %862 = vmatprep.subr.bf16.mxu0 0
  %863 = vmatpush1.bf16.msra.mxu0 0
  %864 = vmatprep.subr.bf16.mxu0 0
  %865 = vmatpush1.bf16.msra.mxu0 0
  %866 = vmatprep.mubr.bf16.mxu0 0
  %867 = vmatmul.mubr.bf16.gmra.mrb[0].mxu0 %v134
  %v868 = vpop.f32.mrb[0].mxu0
  %v869 = vadd.f32 0.0, %v868
  %v870 = vpop.f32.mrb[0].mxu0
  %v871 = vadd.f32 0.0, %v870
  %v872 = vpop.f32.mrb[0].mxu0
  %v873 = vpop.f32.mrb[0].mxu0
  %874 = vdwg.mxu0
  %v875 = vmax.f32 %v660, %v828
  %v876 = vmax.f32 %v661, %v830
  %v877 = vmax.f32 %v662, %v869
  %v878 = vmax.f32 %v663, %v871
  %v879 = vld [vmem:[%s2] sm:$0xff]
  %881 = vset.pattern.permute.xlu0 0
  %882 = vperm.xlu0 %881, %v879
  %v883 = vpop.permute.xlu0 %882
  %v885 = vadd.f32 %v875, %v883
  %v886 = vadd.f32 %v876, %v883
  %v887 = vadd.f32 %v877, %v883
  %v888 = vadd.f32 %v878, %v883
  %v889 = vmax.f32 %v885, 0.0
  %v890 = vmax.f32 %v886, 0.0
  %v891 = vmax.f32 %v887, 0.0
  %v892 = vmax.f32 %v888, 0.0
  %893 = vst [vmem:[%s3] sm:$0xff] %v889
  %894 = vst [vmem:[%s3 + $0x8] sm:$0xff] %v890
  %895 = vst [vmem:[%s3 + $0x10] sm:$0xff] %v891
  %896 = vst [vmem:[%s3 + $0x18] sm:$0xff] %v892
  // Predicated region
  $region14: #{net_forward.3} parent=0 // pred_check
    _
  $region15: #{net_forward.3} parent=0 // pred_check_branch
    %898 = sbr.rel (0) target = $region17
  $region16: #{net_forward.3} parent=0 // pred_region
    _
  $region17: #{net_forward.3} parent=0 // pred_fallthru
    _
  // Predicated region
  $region18: #{net_forward.3} parent=0 // pred_check
    _
  $region19: #{net_forward.3} parent=0 // pred_check_branch
    %900 = sbr.rel (0) target = $region21
  $region20: #{net_forward.3} parent=0 // pred_region
    _
  $region21: #{net_forward.3} parent=0 // pred_fallthru
    _

// kernel: net_forward.4
$region0: #{net_forward.4}
  #allocation0 [shape = 'u32[]', space=smem, size = 0x4, offset = 0x4, fixed_abs, tag = 'smem constant byte address 0x4 - core index']
  #allocation1 [shape = 'u32[144,128]{1,0:T(1,128)}', space=vmem, size = 0x12000, scoped, tag = 'internal scratch']
  %s0 = inlined_call_operand.vmem [shape: bf16[4,150,128], index: 0, kind: input, shape index: {}]
  %s1 = inlined_call_operand.vmem [shape: bf16[16,150], index: 1, kind: input, shape index: {}]
  %s2 = inlined_call_operand.vmem [shape: f32[16,1], index: 2, kind: input, shape index: {}]
  %s3 = inlined_call_operand.vmem [shape: f32[16,128], index: 3, kind: output, shape index: {}]
  %s4 = sld [smem:[#allocation0]]
  $region22: #{net_forward.4} parent=0
    _
  %s6 = ssub.s32 1, %s4
  %s7 = scalar_select 0, %s6, %s4
  // Predicated region
  $region2: #{net_forward.4} parent=0 // pred_check
    _
  $region3: #{net_forward.4} parent=0 // pred_check_branch
    %9 = sbr.rel (0) target = $region5
  $region4: #{net_forward.4} parent=0 // pred_region
    _
  $region5: #{net_forward.4} parent=0 // pred_fallthru
    _
  // Predicated region
  $region6: #{net_forward.4} parent=0 // pred_check
    _
  $region7: #{net_forward.4} parent=0 // pred_check_branch
    %11 = sbr.rel (0) target = $region9
  $region8: #{net_forward.4} parent=0 // pred_region
    _
  $region9: #{net_forward.4} parent=0 // pred_fallthru
    _
  // Predicated region
  $region10: #{net_forward.4} parent=0 // pred_check
    _
  $region11: #{net_forward.4} parent=0 // pred_check_branch
    %13 = sbr.rel (0) target = $region13
  $region12: #{net_forward.4} parent=0 // pred_region
    _
  $region13: #{net_forward.4} parent=0 // pred_fallthru
    _
  %v15 = vld [vmem:[%s1] sm:$0xff]
  %v16 = vld [vmem:[%s1 + $0x8] sm:$0xff]
  %v17 = vld [vmem:[%s0] sm:$0xf]
  %v18 = vld [vmem:[%s0 + $0x4] sm:$0xf]
  %v19 = vld [vmem:[%s0 + $0x8] sm:$0xf]
  %v20 = vld [vmem:[%s0 + $0xc] sm:$0xf]
  %v21 = vld [vmem:[%s0 + $0x10] sm:$0xf]
  %v22 = vld [vmem:[%s0 + $0x14] sm:$0xf]
  %v23 = vld [vmem:[%s0 + $0x18] sm:$0xf]
  %v24 = vld [vmem:[%s0 + $0x1c] sm:$0xf]
  %v25 = vld [vmem:[%s0 + $0x20] sm:$0xf]
  %v26 = vld [vmem:[%s0 + $0x24] sm:$0xf]
  %v27 = vld [vmem:[%s0 + $0x28] sm:$0xf]
  %v28 = vld [vmem:[%s0 + $0x2c] sm:$0xf]
  %v29 = vld [vmem:[%s0 + $0x30] sm:$0xf]
  %v30 = vld [vmem:[%s0 + $0x34] sm:$0xf]
  %v31 = vld [vmem:[%s0 + $0x38] sm:$0xf]
  %v32 = vld [vmem:[%s0 + $0x3c] sm:$0xf]
  %v33 = vld [vmem:[%s0 + $0x40] sm:$0xf]
  %v34 = vld [vmem:[%s0 + $0x44] sm:$0xf]
  %v35 = vld [vmem:[%s0 + $0x48] sm:$0x7]
  %v38 = vunpack.c.l.b16 %v15
  %v39 = vunpack.c.h.b16 %v15
  %v40 = vunpack.c.l.b16 %v16
  %v41 = vunpack.c.h.b16 %v16
  %v42 = vpack.c.b16 %v40, %v38
  %v43 = vpack.c.b16 %v41, %v39
  %v64 = vunpack.c.l.b16 %v17
  %v65 = vunpack.c.l.b16 %v18
  %v66 = vunpack.c.l.b16 %v19
  %v67 = vunpack.c.l.b16 %v20
  %v68 = vunpack.c.l.b16 %v21
  %v69 = vunpack.c.l.b16 %v22
  %v70 = vunpack.c.l.b16 %v23
  %v71 = vunpack.c.l.b16 %v24
  %v72 = vunpack.c.l.b16 %v25
  %v73 = vunpack.c.l.b16 %v26
  %v74 = vunpack.c.l.b16 %v27
  %v75 = vunpack.c.l.b16 %v28
  %v76 = vunpack.c.l.b16 %v29
  %v77 = vunpack.c.l.b16 %v30
  %v78 = vunpack.c.l.b16 %v31
  %v79 = vunpack.c.l.b16 %v32
  %v80 = vunpack.c.l.b16 %v33
  %v81 = vunpack.c.l.b16 %v34
  %v82 = vunpack.c.l.b16 %v35
  %v83 = vpack.c.b16 %v65, %v64
  %v84 = vpack.c.b16 %v67, %v66
  %v85 = vpack.c.b16 %v69, %v68
  %v86 = vpack.c.b16 %v71, %v70
  %v87 = vpack.c.b16 %v73, %v72
  %v88 = vpack.c.b16 %v75, %v74
  %v89 = vpack.c.b16 %v77, %v76
  %v90 = vpack.c.b16 %v79, %v78
  %v91 = vpack.c.b16 %v81, %v80
  %v92 = vpack.c.b16 %v82, %v82
  %vm102 = vcmask 179200
  %v104 = vsel %vm102, %v43, 0
  %vm106 = vcmask 1042432
  %v108 = vsel %vm106, %v92, 0
  %110 = vmatprep.subr.bf16.mxu0 0
  %111 = vmatpush1.bf16.msra.mxu0 %v83
  %112 = vmatprep.subr.bf16.mxu0 0
  %113 = vmatpush1.bf16.msra.mxu0 %v84
  %114 = vmatprep.subr.bf16.mxu0 0
  %115 = vmatpush1.bf16.msra.mxu0 %v85
  %116 = vmatprep.subr.bf16.mxu0 0
  %117 = vmatpush1.bf16.msra.mxu0 %v86
  %118 = vmatprep.subr.bf16.mxu0 0
  %119 = vmatpush1.bf16.msra.mxu0 %v87
  %120 = vmatprep.subr.bf16.mxu0 0
  %121 = vmatpush1.bf16.msra.mxu0 %v88
  %122 = vmatprep.subr.bf16.mxu0 0
  %123 = vmatpush1.bf16.msra.mxu0 %v89
  %124 = vmatprep.subr.bf16.mxu0 0
  %125 = vmatpush1.bf16.msra.mxu0 %v90
  %126 = vmatprep.subr.bf16.mxu0 0
  %127 = vmatpush1.bf16.msra.mxu0 %v91
  %128 = vmatprep.subr.bf16.mxu0 0
  %129 = vmatpush1.bf16.msra.mxu0 %v108
  %130 = vmatprep.subr.bf16.mxu0 0
  %131 = vmatpush1.bf16.msra.mxu0 0
  %132 = vmatprep.subr.bf16.mxu0 0
  %133 = vmatpush1.bf16.msra.mxu0 0
  %134 = vmatprep.subr.bf16.mxu0 0
  %135 = vmatpush1.bf16.msra.mxu0 0
  %136 = vmatprep.subr.bf16.mxu0 0
  %137 = vmatpush1.bf16.msra.mxu0 0
  %138 = vmatprep.subr.bf16.mxu0 0
  %139 = vmatpush1.bf16.msra.mxu0 0
  %140 = vmatprep.subr.bf16.mxu0 0
  %141 = vmatpush1.bf16.msra.mxu0 0
  %142 = vmatprep.mubr.bf16.mxu0 %v104
  %143 = vmatmul.mubr.bf16.gmra.mrb[0].mxu0 %v42
  %v144 = vpop.f32.mrb[0].mxu0
  %v145 = vadd.f32 0.0, %v144
  %v146 = vpop.f32.mrb[0].mxu0
  %v147 = vpop.f32.mrb[0].mxu0
  %v148 = vadd.f32 0.0, %v147
  %v149 = vpop.f32.mrb[0].mxu0
  %150 = vdwg.mxu0
  %s151 = scalar_lea.vmem %s0, 76
  %v152 = vld [vmem:[%s151] sm:$0xf]
  %v153 = vld [vmem:[%s151 + $0x4] sm:$0xf]
  %v154 = vld [vmem:[%s151 + $0x8] sm:$0xf]
  %v155 = vld [vmem:[%s151 + $0xc] sm:$0xf]
  %v156 = vld [vmem:[%s151 + $0x10] sm:$0xf]
  %v157 = vld [vmem:[%s151 + $0x14] sm:$0xf]
  %v158 = vld [vmem:[%s151 + $0x18] sm:$0xf]
  %v159 = vld [vmem:[%s151 + $0x1c] sm:$0xf]
  %v160 = vld [vmem:[%s151 + $0x20] sm:$0xf]
  %v161 = vld [vmem:[%s151 + $0x24] sm:$0xf]
  %v162 = vld [vmem:[%s151 + $0x28] sm:$0xf]
  %v163 = vld [vmem:[%s151 + $0x2c] sm:$0xf]
  %v164 = vld [vmem:[%s151 + $0x30] sm:$0xf]
  %v165 = vld [vmem:[%s151 + $0x34] sm:$0xf]
  %v166 = vld [vmem:[%s151 + $0x38] sm:$0xf]
  %v167 = vld [vmem:[%s151 + $0x3c] sm:$0xf]
  %v168 = vld [vmem:[%s151 + $0x40] sm:$0xf]
  %v169 = vld [vmem:[%s151 + $0x44] sm:$0xf]
  %v170 = vld [vmem:[%s151 + $0x48] sm:$0x7]
  %v190 = vunpack.c.l.b16 %v152
  %v191 = vunpack.c.l.b16 %v153
  %v192 = vunpack.c.l.b16 %v154
  %v193 = vunpack.c.l.b16 %v155
  %v194 = vunpack.c.l.b16 %v156
  %v195 = vunpack.c.l.b16 %v157
  %v196 = vunpack.c.l.b16 %v158
  %v197 = vunpack.c.l.b16 %v159
  %v198 = vunpack.c.l.b16 %v160
  %v199 = vunpack.c.l.b16 %v161
  %v200 = vunpack.c.l.b16 %v162
  %v201 = vunpack.c.l.b16 %v163
  %v202 = vunpack.c.l.b16 %v164
  %v203 = vunpack.c.l.b16 %v165
  %v204 = vunpack.c.l.b16 %v166
  %v205 = vunpack.c.l.b16 %v167
  %v206 = vunpack.c.l.b16 %v168
  %v207 = vunpack.c.l.b16 %v169
  %v208 = vunpack.c.l.b16 %v170
  %v209 = vpack.c.b16 %v191, %v190
  %v210 = vpack.c.b16 %v193, %v192
  %v211 = vpack.c.b16 %v195, %v194
  %v212 = vpack.c.b16 %v197, %v196
  %v213 = vpack.c.b16 %v199, %v198
  %v214 = vpack.c.b16 %v201, %v200
  %v215 = vpack.c.b16 %v203, %v202
  %v216 = vpack.c.b16 %v205, %v204
  %v217 = vpack.c.b16 %v207, %v206
  %v218 = vpack.c.b16 %v208, %v208
  %v229 = vsel %vm106, %v218, 0
  %231 = vmatprep.subr.bf16.mxu0 0
  %232 = vmatpush1.bf16.msra.mxu0 %v209
  %233 = vmatprep.subr.bf16.mxu0 0
  %234 = vmatpush1.bf16.msra.mxu0 %v210
  %235 = vmatprep.subr.bf16.mxu0 0
  %236 = vmatpush1.bf16.msra.mxu0 %v211
  %237 = vmatprep.subr.bf16.mxu0 0
  %238 = vmatpush1.bf16.msra.mxu0 %v212
  %239 = vmatprep.subr.bf16.mxu0 0
  %240 = vmatpush1.bf16.msra.mxu0 %v213
  %241 = vmatprep.subr.bf16.mxu0 0
  %242 = vmatpush1.bf16.msra.mxu0 %v214
  %243 = vmatprep.subr.bf16.mxu0 0
  %244 = vmatpush1.bf16.msra.mxu0 %v215
  %245 = vmatprep.subr.bf16.mxu0 0
  %246 = vmatpush1.bf16.msra.mxu0 %v216
  %247 = vmatprep.subr.bf16.mxu0 0
  %248 = vmatpush1.bf16.msra.mxu0 %v217
  %249 = vmatprep.subr.bf16.mxu0 0
  %250 = vmatpush1.bf16.msra.mxu0 %v229
  %251 = vmatprep.subr.bf16.mxu0 0
  %252 = vmatpush1.bf16.msra.mxu0 0
  %253 = vmatprep.subr.bf16.mxu0 0
  %254 = vmatpush1.bf16.msra.mxu0 0
  %255 = vmatprep.subr.bf16.mxu0 0
  %256 = vmatpush1.bf16.msra.mxu0 0
  %257 = vmatprep.subr.bf16.mxu0 0
  %258 = vmatpush1.bf16.msra.mxu0 0
  %259 = vmatprep.subr.bf16.mxu0 0
  %260 = vmatpush1.bf16.msra.mxu0 0
  %261 = vmatprep.subr.bf16.mxu0 0
  %262 = vmatpush1.bf16.msra.mxu0 0
  %263 = vmatprep.mubr.bf16.mxu0 %v104
  %264 = vmatmul.mubr.bf16.gmra.mrb[0].mxu0 %v42
  %v265 = vpop.f32.mrb[0].mxu0
  %v266 = vadd.f32 0.0, %v265
  %v267 = vpop.f32.mrb[0].mxu0
  %v268 = vpop.f32.mrb[0].mxu0
  %v269 = vadd.f32 0.0, %v268
  %v270 = vpop.f32.mrb[0].mxu0
  %271 = vdwg.mxu0
  %v272 = vmax.f32 %v145, %v266
  %v273 = vmax.f32 %v148, %v269
  %s274 = scalar_lea.vmem %s0, 152
  %v275 = vld [vmem:[%s274] sm:$0xf]
  %v276 = vld [vmem:[%s274 + $0x4] sm:$0xf]
  %v277 = vld [vmem:[%s274 + $0x8] sm:$0xf]
  %v278 = vld [vmem:[%s274 + $0xc] sm:$0xf]
  %v279 = vld [vmem:[%s274 + $0x10] sm:$0xf]
  %v280 = vld [vmem:[%s274 + $0x14] sm:$0xf]
  %v281 = vld [vmem:[%s274 + $0x18] sm:$0xf]
  %v282 = vld [vmem:[%s274 + $0x1c] sm:$0xf]
  %v283 = vld [vmem:[%s274 + $0x20] sm:$0xf]
  %v284 = vld [vmem:[%s274 + $0x24] sm:$0xf]
  %v285 = vld [vmem:[%s274 + $0x28] sm:$0xf]
  %v286 = vld [vmem:[%s274 + $0x2c] sm:$0xf]
  %v287 = vld [vmem:[%s274 + $0x30] sm:$0xf]
  %v288 = vld [vmem:[%s274 + $0x34] sm:$0xf]
  %v289 = vld [vmem:[%s274 + $0x38] sm:$0xf]
  %v290 = vld [vmem:[%s274 + $0x3c] sm:$0xf]
  %v291 = vld [vmem:[%s274 + $0x40] sm:$0xf]
  %v292 = vld [vmem:[%s274 + $0x44] sm:$0xf]
  %v293 = vld [vmem:[%s274 + $0x48] sm:$0x7]
  %v313 = vunpack.c.l.b16 %v275
  %v314 = vunpack.c.l.b16 %v276
  %v315 = vunpack.c.l.b16 %v277
  %v316 = vunpack.c.l.b16 %v278
  %v317 = vunpack.c.l.b16 %v279
  %v318 = vunpack.c.l.b16 %v280
  %v319 = vunpack.c.l.b16 %v281
  %v320 = vunpack.c.l.b16 %v282
  %v321 = vunpack.c.l.b16 %v283
  %v322 = vunpack.c.l.b16 %v284
  %v323 = vunpack.c.l.b16 %v285
  %v324 = vunpack.c.l.b16 %v286
  %v325 = vunpack.c.l.b16 %v287
  %v326 = vunpack.c.l.b16 %v288
  %v327 = vunpack.c.l.b16 %v289
  %v328 = vunpack.c.l.b16 %v290
  %v329 = vunpack.c.l.b16 %v291
  %v330 = vunpack.c.l.b16 %v292
  %v331 = vunpack.c.l.b16 %v293
  %v332 = vpack.c.b16 %v314, %v313
  %v333 = vpack.c.b16 %v316, %v315
  %v334 = vpack.c.b16 %v318, %v317
  %v335 = vpack.c.b16 %v320, %v319
  %v336 = vpack.c.b16 %v322, %v321
  %v337 = vpack.c.b16 %v324, %v323
  %v338 = vpack.c.b16 %v326, %v325
  %v339 = vpack.c.b16 %v328, %v327
  %v340 = vpack.c.b16 %v330, %v329
  %v341 = vpack.c.b16 %v331, %v331
  %v352 = vsel %vm106, %v341, 0
  %354 = vmatprep.subr.bf16.mxu0 0
  %355 = vmatpush1.bf16.msra.mxu0 %v332
  %356 = vmatprep.subr.bf16.mxu0 0
  %357 = vmatpush1.bf16.msra.mxu0 %v333
  %358 = vmatprep.subr.bf16.mxu0 0
  %359 = vmatpush1.bf16.msra.mxu0 %v334
  %360 = vmatprep.subr.bf16.mxu0 0
  %361 = vmatpush1.bf16.msra.mxu0 %v335
  %362 = vmatprep.subr.bf16.mxu0 0
  %363 = vmatpush1.bf16.msra.mxu0 %v336
  %364 = vmatprep.subr.bf16.mxu0 0
  %365 = vmatpush1.bf16.msra.mxu0 %v337
  %366 = vmatprep.subr.bf16.mxu0 0
  %367 = vmatpush1.bf16.msra.mxu0 %v338
  %368 = vmatprep.subr.bf16.mxu0 0
  %369 = vmatpush1.bf16.msra.mxu0 %v339
  %370 = vmatprep.subr.bf16.mxu0 0
  %371 = vmatpush1.bf16.msra.mxu0 %v340
  %372 = vmatprep.subr.bf16.mxu0 0
  %373 = vmatpush1.bf16.msra.mxu0 %v352
  %374 = vmatprep.subr.bf16.mxu0 0
  %375 = vmatpush1.bf16.msra.mxu0 0
  %376 = vmatprep.subr.bf16.mxu0 0
  %377 = vmatpush1.bf16.msra.mxu0 0
  %378 = vmatprep.subr.bf16.mxu0 0
  %379 = vmatpush1.bf16.msra.mxu0 0
  %380 = vmatprep.subr.bf16.mxu0 0
  %381 = vmatpush1.bf16.msra.mxu0 0
  %382 = vmatprep.subr.bf16.mxu0 0
  %383 = vmatpush1.bf16.msra.mxu0 0
  %384 = vmatprep.subr.bf16.mxu0 0
  %385 = vmatpush1.bf16.msra.mxu0 0
  %386 = vmatprep.mubr.bf16.mxu0 %v104
  %387 = vmatmul.mubr.bf16.gmra.mrb[0].mxu0 %v42
  %v388 = vpop.f32.mrb[0].mxu0
  %v389 = vadd.f32 0.0, %v388
  %v390 = vpop.f32.mrb[0].mxu0
  %v391 = vpop.f32.mrb[0].mxu0
  %v392 = vadd.f32 0.0, %v391
  %v393 = vpop.f32.mrb[0].mxu0
  %394 = vdwg.mxu0
  %v395 = vmax.f32 %v272, %v389
  %v396 = vmax.f32 %v273, %v392
  %s397 = scalar_lea.vmem %s0, 228
  %v398 = vld [vmem:[%s397] sm:$0xf]
  %v399 = vld [vmem:[%s397 + $0x4] sm:$0xf]
  %v400 = vld [vmem:[%s397 + $0x8] sm:$0xf]
  %v401 = vld [vmem:[%s397 + $0xc] sm:$0xf]
  %v402 = vld [vmem:[%s397 + $0x10] sm:$0xf]
  %v403 = vld [vmem:[%s397 + $0x14] sm:$0xf]
  %v404 = vld [vmem:[%s397 + $0x18] sm:$0xf]
  %v405 = vld [vmem:[%s397 + $0x1c] sm:$0xf]
  %v406 = vld [vmem:[%s397 + $0x20] sm:$0xf]
  %v407 = vld [vmem:[%s397 + $0x24] sm:$0xf]
  %v408 = vld [vmem:[%s397 + $0x28] sm:$0xf]
  %v409 = vld [vmem:[%s397 + $0x2c] sm:$0xf]
  %v410 = vld [vmem:[%s397 + $0x30] sm:$0xf]
  %v411 = vld [vmem:[%s397 + $0x34] sm:$0xf]
  %v412 = vld [vmem:[%s397 + $0x38] sm:$0xf]
  %v413 = vld [vmem:[%s397 + $0x3c] sm:$0xf]
  %v414 = vld [vmem:[%s397 + $0x40] sm:$0xf]
  %v415 = vld [vmem:[%s397 + $0x44] sm:$0xf]
  %v416 = vld [vmem:[%s397 + $0x48] sm:$0x7]
  %v436 = vunpack.c.l.b16 %v398
  %v437 = vunpack.c.l.b16 %v399
  %v438 = vunpack.c.l.b16 %v400
  %v439 = vunpack.c.l.b16 %v401
  %v440 = vunpack.c.l.b16 %v402
  %v441 = vunpack.c.l.b16 %v403
  %v442 = vunpack.c.l.b16 %v404
  %v443 = vunpack.c.l.b16 %v405
  %v444 = vunpack.c.l.b16 %v406
  %v445 = vunpack.c.l.b16 %v407
  %v446 = vunpack.c.l.b16 %v408
  %v447 = vunpack.c.l.b16 %v409
  %v448 = vunpack.c.l.b16 %v410
  %v449 = vunpack.c.l.b16 %v411
  %v450 = vunpack.c.l.b16 %v412
  %v451 = vunpack.c.l.b16 %v413
  %v452 = vunpack.c.l.b16 %v414
  %v453 = vunpack.c.l.b16 %v415
  %v454 = vunpack.c.l.b16 %v416
  %v455 = vpack.c.b16 %v437, %v436
  %v456 = vpack.c.b16 %v439, %v438
  %v457 = vpack.c.b16 %v441, %v440
  %v458 = vpack.c.b16 %v443, %v442
  %v459 = vpack.c.b16 %v445, %v444
  %v460 = vpack.c.b16 %v447, %v446
  %v461 = vpack.c.b16 %v449, %v448
  %v462 = vpack.c.b16 %v451, %v450
  %v463 = vpack.c.b16 %v453, %v452
  %v464 = vpack.c.b16 %v454, %v454
  %v475 = vsel %vm106, %v464, 0
  %477 = vmatprep.subr.bf16.mxu0 0
  %478 = vmatpush1.bf16.msra.mxu0 %v455
  %479 = vmatprep.subr.bf16.mxu0 0
  %480 = vmatpush1.bf16.msra.mxu0 %v456
  %481 = vmatprep.subr.bf16.mxu0 0
  %482 = vmatpush1.bf16.msra.mxu0 %v457
  %483 = vmatprep.subr.bf16.mxu0 0
  %484 = vmatpush1.bf16.msra.mxu0 %v458
  %485 = vmatprep.subr.bf16.mxu0 0
  %486 = vmatpush1.bf16.msra.mxu0 %v459
  %487 = vmatprep.subr.bf16.mxu0 0
  %488 = vmatpush1.bf16.msra.mxu0 %v460
  %489 = vmatprep.subr.bf16.mxu0 0
  %490 = vmatpush1.bf16.msra.mxu0 %v461
  %491 = vmatprep.subr.bf16.mxu0 0
  %492 = vmatpush1.bf16.msra.mxu0 %v462
  %493 = vmatprep.subr.bf16.mxu0 0
  %494 = vmatpush1.bf16.msra.mxu0 %v463
  %495 = vmatprep.subr.bf16.mxu0 0
  %496 = vmatpush1.bf16.msra.mxu0 %v475
  %497 = vmatprep.subr.bf16.mxu0 0
  %498 = vmatpush1.bf16.msra.mxu0 0
  %499 = vmatprep.subr.bf16.mxu0 0
  %500 = vmatpush1.bf16.msra.mxu0 0
  %501 = vmatprep.subr.bf16.mxu0 0
  %502 = vmatpush1.bf16.msra.mxu0 0
  %503 = vmatprep.subr.bf16.mxu0 0
  %504 = vmatpush1.bf16.msra.mxu0 0
  %505 = vmatprep.subr.bf16.mxu0 0
  %506 = vmatpush1.bf16.msra.mxu0 0
  %507 = vmatprep.subr.bf16.mxu0 0
  %508 = vmatpush1.bf16.msra.mxu0 0
  %509 = vmatprep.mubr.bf16.mxu0 %v104
  %510 = vmatmul.mubr.bf16.gmra.mrb[0].mxu0 %v42
  %v511 = vpop.f32.mrb[0].mxu0
  %v512 = vadd.f32 0.0, %v511
  %v513 = vpop.f32.mrb[0].mxu0
  %v514 = vpop.f32.mrb[0].mxu0
  %v515 = vadd.f32 0.0, %v514
  %v516 = vpop.f32.mrb[0].mxu0
  %517 = vdwg.mxu0
  %v518 = vmax.f32 %v395, %v512
  %v519 = vmax.f32 %v396, %v515
  %v520 = vld [vmem:[%s2] sm:$0xff]
  %v521 = vld [vmem:[%s2 + $0x8] sm:$0xff]
  %523 = vset.pattern.permute.xlu0 0
  %524 = vperm.xlu0 %523, %v520
  %v525 = vpop.permute.xlu0 %524
  %528 = vset.pattern.permute.xlu0 0
  %529 = vperm.xlu0 %528, %v521
  %v530 = vpop.permute.xlu0 %529
  %v532 = vadd.f32 %v518, %v525
  %v533 = vadd.f32 %v519, %v530
  %v534 = vmax.f32 %v532, 0.0
  %v535 = vmax.f32 %v533, 0.0
  %536 = vst [vmem:[%s3] sm:$0xff] %v534
  %537 = vst [vmem:[%s3 + $0x8] sm:$0xff] %v535
  // Predicated region
  $region14: #{net_forward.4} parent=0 // pred_check
    _
  $region15: #{net_forward.4} parent=0 // pred_check_branch
    %539 = sbr.rel (0) target = $region17
  $region16: #{net_forward.4} parent=0 // pred_region
    _
  $region17: #{net_forward.4} parent=0 // pred_fallthru
    _
  // Predicated region
  $region18: #{net_forward.4} parent=0 // pred_check
    _
  $region19: #{net_forward.4} parent=0 // pred_check_branch
    %541 = sbr.rel (0) target = $region21
  $region20: #{net_forward.4} parent=0 // pred_region
    _
  $region21: #{net_forward.4} parent=0 // pred_fallthru
    _

// kernel: net_forward.5
$region0: #{net_forward.5}
  #allocation0 [shape = 'u32[]', space=smem, size = 0x4, offset = 0x4, fixed_abs, tag = 'smem constant byte address 0x4 - core index']
  #allocation1 [shape = 'u32[144,128]{1,0:T(1,128)}', space=vmem, size = 0x12000, scoped, tag = 'internal scratch']
  %s0 = inlined_call_operand.vmem [shape: f32[2,400], index: 0, kind: input, shape index: {}]
  %s1 = inlined_call_operand.vmem [shape: f32[400,128], index: 1, kind: input, shape index: {}]
  %s2 = inlined_call_operand.vmem [shape: f32[1,128], index: 2, kind: input, shape index: {}]
  %s3 = inlined_call_operand.vmem [shape: f32[128,128], index: 3, kind: input, shape index: {}]
  %s4 = inlined_call_operand.vmem [shape: f32[1,128], index: 4, kind: input, shape index: {}]
  %s5 = inlined_call_operand.vmem [shape: f32[128,128], index: 5, kind: input, shape index: {}]
  %s6 = inlined_call_operand.vmem [shape: f32[1,128], index: 6, kind: input, shape index: {}]
  %s7 = inlined_call_operand.hbm [shape: f32[2,128], index: 7, kind: output, shape index: {}]
  %s8 = sld [smem:[#allocation0]]
  $region38: #{net_forward.5} parent=0
    _
  %s10 = ssub.s32 1, %s8
  %s11 = scalar_select 0, %s10, %s8
  $region1: #{net_forward.5} parent=0
    #allocation2 [shape = 'u8[1024]{0}', space=vmem, size = 0x400, scoped, tag = 'output window, operand 0, single buffered']
    #allocation3 [shape = 's32[1]{0}', space=sflag, size = 0x4, scoped, tag = 'scoped memory for net_forward.5']
    %12 = vsyncpa [#allocation3], 0
    // Predicated region
    $region2: #{net_forward.5} parent=1 // pred_check
      _
    $region3: #{net_forward.5} parent=1 // pred_check_branch
      %14 = sbr.rel (0) target = $region5
    $region4: #{net_forward.5} parent=1 // pred_region
      _
    $region5: #{net_forward.5} parent=1 // pred_fallthru
      _
    // Predicated region
    $region6: #{net_forward.5} parent=1 // pred_check
      _
    $region7: #{net_forward.5} parent=1 // pred_check_branch
      %16 = sbr.rel (0) target = $region9
    $region8: #{net_forward.5} parent=1 // pred_region
      _
    $region9: #{net_forward.5} parent=1 // pred_fallthru
      _
    // Predicated region
    $region10: #{net_forward.5} parent=1 // pred_check
      _
    $region11: #{net_forward.5} parent=1 // pred_check_branch
      %18 = sbr.rel (0) target = $region13
    $region12: #{net_forward.5} parent=1 // pred_region
      _
    $region13: #{net_forward.5} parent=1 // pred_fallthru
      _
    // Predicated region
    $region14: #{net_forward.5} parent=1 // pred_check
      _
    $region15: #{net_forward.5} parent=1 // pred_check_branch
      %20 = sbr.rel (0) target = $region17
    $region16: #{net_forward.5} parent=1 // pred_region
      _
    $region17: #{net_forward.5} parent=1 // pred_fallthru
      _
    // Predicated region
    $region18: #{net_forward.5} parent=1 // pred_check
      _
    $region19: #{net_forward.5} parent=1 // pred_check_branch
      %22 = sbr.rel (0) target = $region21
    $region20: #{net_forward.5} parent=1 // pred_region
      _
    $region21: #{net_forward.5} parent=1 // pred_fallthru
      _
    // Predicated region
    $region22: #{net_forward.5} parent=1 // pred_check
      _
    $region23: #{net_forward.5} parent=1 // pred_check_branch
      %24 = sbr.rel (0) target = $region25
    $region24: #{net_forward.5} parent=1 // pred_region
      _
    $region25: #{net_forward.5} parent=1 // pred_fallthru
      _
    // Predicated region
    $region26: #{net_forward.5} parent=1 // pred_check
      _
    $region27: #{net_forward.5} parent=1 // pred_check_branch
      %26 = sbr.rel (0) target = $region29
    $region28: #{net_forward.5} parent=1 // pred_region
      _
    $region29: #{net_forward.5} parent=1 // pred_fallthru
      _
    %v27 = vld [vmem:[%s0] sm:$0xff]
    %v28 = vld [vmem:[%s1] sm:$0xff]
    %v29 = vld [vmem:[%s1 + $0x8] sm:$0xff]
    %v30 = vld [vmem:[%s1 + $0x10] sm:$0xff]
    %v31 = vld [vmem:[%s1 + $0x18] sm:$0xff]
    %v32 = vld [vmem:[%s1 + $0x20] sm:$0xff]
    %v33 = vld [vmem:[%s1 + $0x28] sm:$0xff]
    %v34 = vld [vmem:[%s1 + $0x30] sm:$0xff]
    %v35 = vld [vmem:[%s1 + $0x38] sm:$0xff]
    %v36 = vld [vmem:[%s1 + $0x40] sm:$0xff]
    %v37 = vld [vmem:[%s1 + $0x48] sm:$0xff]
    %v38 = vld [vmem:[%s1 + $0x50] sm:$0xff]
    %v39 = vld [vmem:[%s1 + $0x58] sm:$0xff]
    %v40 = vld [vmem:[%s1 + $0x60] sm:$0xff]
    %v41 = vld [vmem:[%s1 + $0x68] sm:$0xff]
    %v42 = vld [vmem:[%s1 + $0x70] sm:$0xff]
    %v43 = vld [vmem:[%s1 + $0x78] sm:$0xff]
    %v44 = vld [vmem:[%s1 + $0x80] sm:$0xff]
    %v45 = vld [vmem:[%s1 + $0x88] sm:$0xff]
    %v46 = vld [vmem:[%s1 + $0x90] sm:$0xff]
    %v47 = vld [vmem:[%s1 + $0x98] sm:$0xff]
    %v48 = vld [vmem:[%s1 + $0xa0] sm:$0xff]
    %v49 = vld [vmem:[%s1 + $0xa8] sm:$0xff]
    %v50 = vld [vmem:[%s1 + $0xb0] sm:$0xff]
    %v51 = vld [vmem:[%s1 + $0xb8] sm:$0xff]
    %v52 = vld [vmem:[%s1 + $0xc0] sm:$0xff]
    %v53 = vld [vmem:[%s1 + $0xc8] sm:$0xff]
    %v54 = vld [vmem:[%s1 + $0xd0] sm:$0xff]
    %v55 = vld [vmem:[%s1 + $0xd8] sm:$0xff]
    %v56 = vld [vmem:[%s1 + $0xe0] sm:$0xff]
    %v57 = vld [vmem:[%s1 + $0xe8] sm:$0xff]
    %v58 = vld [vmem:[%s1 + $0xf0] sm:$0xff]
    %v59 = vld [vmem:[%s1 + $0xf8] sm:$0xff]
    %v60 = vld [vmem:[%s1 + $0x100] sm:$0xff]
    %v61 = vld [vmem:[%s1 + $0x108] sm:$0xff]
    %v62 = vld [vmem:[%s1 + $0x110] sm:$0xff]
    %v63 = vld [vmem:[%s1 + $0x118] sm:$0xff]
    %v64 = vld [vmem:[%s1 + $0x120] sm:$0xff]
    %v65 = vld [vmem:[%s1 + $0x128] sm:$0xff]
    %v66 = vld [vmem:[%s1 + $0x130] sm:$0xff]
    %v67 = vld [vmem:[%s1 + $0x138] sm:$0xff]
    %v68 = vld [vmem:[%s1 + $0x140] sm:$0xff]
    %v69 = vld [vmem:[%s1 + $0x148] sm:$0xff]
    %v70 = vld [vmem:[%s1 + $0x150] sm:$0xff]
    %v71 = vld [vmem:[%s1 + $0x158] sm:$0xff]
    %v72 = vld [vmem:[%s1 + $0x160] sm:$0xff]
    %v73 = vld [vmem:[%s1 + $0x168] sm:$0xff]
    %v74 = vld [vmem:[%s1 + $0x170] sm:$0xff]
    %v75 = vld [vmem:[%s1 + $0x178] sm:$0xff]
    %v76 = vld [vmem:[%s1 + $0x180] sm:$0xff]
    %v77 = vld [vmem:[%s1 + $0x188] sm:$0xff]
    %v78 = vld [vmem:[%s2] sm:$0x1]
    %v80 = vlaneseq
    %v81 = vshrl.u32 %v80, 7
    %v82 = vsub.s32 0, %v81
    %v83 = vrot.slane %v78, %v82
    %v86 = vcombine.high %v27, %v27
    %v88 = vunpack.c.l.s4 1983009808
    %v89 = vunpack.c.0.s8 %v88
    %v90 = vlaneseq
    %v91 = vshrl.u32 %v90, 7
    %v92 = vsub.s32 %v89, %v91
    %v93 = vrot.slane %v27, %v92
    %v95 = vunpack.c.l.s4 1983009808
    %v96 = vunpack.c.0.s8 %v95
    %v97 = vlaneseq
    %v98 = vshrl.u32 %v97, 7
    %v99 = vsub.s32 %v96, %v98
    %v100 = vrot.slane %v86, %v99
    %v101 = vcombine.high %v93, %v93
    %v102 = vcombine.high %v100, %v100
    %vm106 = vcmask 130048
    %v107 = vsel %vm106, %v102, 0
    %109 = vmatprep.subr.mxu0 0.0
    %110 = vmatpush1.msra.mxu0 %v28
    %111 = vmatprep.subr.mxu0 0.0
    %112 = vmatpush1.msra.mxu0 %v29
    %113 = vmatprep.subr.mxu0 0.0
    %114 = vmatpush1.msra.mxu0 %v30
    %115 = vmatprep.subr.mxu0 0.0
    %116 = vmatpush1.msra.mxu0 %v31
    %117 = vmatprep.subr.mxu0 0.0
    %118 = vmatpush1.msra.mxu0 %v32
    %119 = vmatprep.subr.mxu0 0.0
    %120 = vmatpush1.msra.mxu0 %v33
    %121 = vmatprep.subr.mxu0 0.0
    %122 = vmatpush1.msra.mxu0 %v34
    %123 = vmatprep.subr.mxu0 0.0
    %124 = vmatpush1.msra.mxu0 %v35
    %125 = vmatprep.subr.mxu0 0.0
    %126 = vmatpush1.msra.mxu0 %v36
    %127 = vmatprep.subr.mxu0 0.0
    %128 = vmatpush1.msra.mxu0 %v37
    %129 = vmatprep.subr.mxu0 0.0
    %130 = vmatpush1.msra.mxu0 %v38
    %131 = vmatprep.subr.mxu0 0.0
    %132 = vmatpush1.msra.mxu0 %v39
    %133 = vmatprep.subr.mxu0 0.0
    %134 = vmatpush1.msra.mxu0 %v40
    %135 = vmatprep.subr.mxu0 0.0
    %136 = vmatpush1.msra.mxu0 %v41
    %137 = vmatprep.subr.mxu0 0.0
    %138 = vmatpush1.msra.mxu0 %v42
    %139 = vmatprep.subr.mxu0 0.0
    %140 = vmatpush1.msra.mxu0 %v43
    %141 = vmatprep.subr.mxu0 0.0
    %142 = vmatpush1.msra.mxu0 %v44
    %143 = vmatprep.subr.mxu0 0.0
    %144 = vmatpush1.msra.mxu0 %v45
    %145 = vmatprep.subr.mxu0 0.0
    %146 = vmatpush1.msra.mxu0 %v46
    %147 = vmatprep.subr.mxu0 0.0
    %148 = vmatpush1.msra.mxu0 %v47
    %149 = vmatprep.subr.mxu0 0.0
    %150 = vmatpush1.msra.mxu0 %v48
    %151 = vmatprep.subr.mxu0 0.0
    %152 = vmatpush1.msra.mxu0 %v49
    %153 = vmatprep.subr.mxu0 0.0
    %154 = vmatpush1.msra.mxu0 %v50
    %155 = vmatprep.subr.mxu0 0.0
    %156 = vmatpush1.msra.mxu0 %v51
    %157 = vmatprep.subr.mxu0 0.0
    %158 = vmatpush1.msra.mxu0 %v52
    %159 = vmatprep.subr.mxu0 0.0
    %160 = vmatpush1.msra.mxu0 %v53
    %161 = vmatprep.subr.mxu0 0.0
    %162 = vmatpush1.msra.mxu0 %v54
    %163 = vmatprep.subr.mxu0 0.0
    %164 = vmatpush1.msra.mxu0 %v55
    %165 = vmatprep.subr.mxu0 0.0
    %166 = vmatpush1.msra.mxu0 %v56
    %167 = vmatprep.subr.mxu0 0.0
    %168 = vmatpush1.msra.mxu0 %v57
    %169 = vmatprep.subr.mxu0 0.0
    %170 = vmatpush1.msra.mxu0 %v58
    %171 = vmatprep.subr.mxu0 0.0
    %172 = vmatpush1.msra.mxu0 %v59
    %173 = vmatprep.mubr.f32.mxu0 %v101
    %174 = vmatmul.mubr.f32.gmra.mrb[0].mxu0 %v93
    %v175 = vpop.f32.mrb[0].mxu0
    %v176 = vadd.f32 %v83, %v175
    %v177 = vpop.f32.mrb[0].mxu0
    %178 = vdwg.mxu0
    %179 = vmatprep.subr.mxu0 0.0
    %180 = vmatpush1.msra.mxu0 %v60
    %181 = vmatprep.subr.mxu0 0.0
    %182 = vmatpush1.msra.mxu0 %v61
    %183 = vmatprep.subr.mxu0 0.0
    %184 = vmatpush1.msra.mxu0 %v62
    %185 = vmatprep.subr.mxu0 0.0
    %186 = vmatpush1.msra.mxu0 %v63
    %187 = vmatprep.subr.mxu0 0.0
    %188 = vmatpush1.msra.mxu0 %v64
    %189 = vmatprep.subr.mxu0 0.0
    %190 = vmatpush1.msra.mxu0 %v65
    %191 = vmatprep.subr.mxu0 0.0
    %192 = vmatpush1.msra.mxu0 %v66
    %193 = vmatprep.subr.mxu0 0.0
    %194 = vmatpush1.msra.mxu0 %v67
    %195 = vmatprep.subr.mxu0 0.0
    %196 = vmatpush1.msra.mxu0 %v68
    %197 = vmatprep.subr.mxu0 0.0
    %198 = vmatpush1.msra.mxu0 %v69
    %199 = vmatprep.subr.mxu0 0.0
    %200 = vmatpush1.msra.mxu0 %v70
    %201 = vmatprep.subr.mxu0 0.0
    %202 = vmatpush1.msra.mxu0 %v71
    %203 = vmatprep.subr.mxu0 0.0
    %204 = vmatpush1.msra.mxu0 %v72
    %205 = vmatprep.subr.mxu0 0.0
    %206 = vmatpush1.msra.mxu0 %v73
    %207 = vmatprep.subr.mxu0 0.0
    %208 = vmatpush1.msra.mxu0 %v74
    %209 = vmatprep.subr.mxu0 0.0
    %210 = vmatpush1.msra.mxu0 %v75
    %211 = vmatprep.subr.mxu0 0.0
    %212 = vmatpush1.msra.mxu0 %v76
    %213 = vmatprep.subr.mxu0 0.0
    %214 = vmatpush1.msra.mxu0 %v77
    %215 = vmatprep.subr.mxu0 0.0
    %216 = vmatpush1.msra.mxu0 0.0
    %217 = vmatprep.subr.mxu0 0.0
    %218 = vmatpush1.msra.mxu0 0.0
    %219 = vmatprep.subr.mxu0 0.0
    %220 = vmatpush1.msra.mxu0 0.0
    %221 = vmatprep.subr.mxu0 0.0
    %222 = vmatpush1.msra.mxu0 0.0
    %223 = vmatprep.subr.mxu0 0.0
    %224 = vmatpush1.msra.mxu0 0.0
    %225 = vmatprep.subr.mxu0 0.0
    %226 = vmatpush1.msra.mxu0 0.0
    %227 = vmatprep.subr.mxu0 0.0
    %228 = vmatpush1.msra.mxu0 0.0
    %229 = vmatprep.subr.mxu0 0.0
    %230 = vmatpush1.msra.mxu0 0.0
    %231 = vmatprep.subr.mxu0 0.0
    %232 = vmatpush1.msra.mxu0 0.0
    %233 = vmatprep.subr.mxu0 0.0
    %234 = vmatpush1.msra.mxu0 0.0
    %235 = vmatprep.subr.mxu0 0.0
    %236 = vmatpush1.msra.mxu0 0.0
    %237 = vmatprep.subr.mxu0 0.0
    %238 = vmatpush1.msra.mxu0 0.0
    %239 = vmatprep.subr.mxu0 0.0
    %240 = vmatpush1.msra.mxu0 0.0
    %241 = vmatprep.subr.mxu0 0.0
    %242 = vmatpush1.msra.mxu0 0.0
    %243 = vmatprep.mubr.f32.mxu0 %v107
    %244 = vmatmul.mubr.f32.gmra.mrb[0].mxu0 %v100
    %v245 = vpop.f32.mrb[0].mxu0
    %v246 = vadd.f32 %v176, %v245
    %v247 = vpop.f32.mrb[0].mxu0
    %248 = vdwg.mxu0
    %v249 = vmax.f32 %v246, 0.0
    %v250 = vld [vmem:[%s3] sm:$0xff]
    %v251 = vld [vmem:[%s3 + $0x8] sm:$0xff]
    %v252 = vld [vmem:[%s3 + $0x10] sm:$0xff]
    %v253 = vld [vmem:[%s3 + $0x18] sm:$0xff]
    %v254 = vld [vmem:[%s3 + $0x20] sm:$0xff]
    %v255 = vld [vmem:[%s3 + $0x28] sm:$0xff]
    %v256 = vld [vmem:[%s3 + $0x30] sm:$0xff]
    %v257 = vld [vmem:[%s3 + $0x38] sm:$0xff]
    %v258 = vld [vmem:[%s3 + $0x40] sm:$0xff]
    %v259 = vld [vmem:[%s3 + $0x48] sm:$0xff]
    %v260 = vld [vmem:[%s3 + $0x50] sm:$0xff]
    %v261 = vld [vmem:[%s3 + $0x58] sm:$0xff]
    %v262 = vld [vmem:[%s3 + $0x60] sm:$0xff]
    %v263 = vld [vmem:[%s3 + $0x68] sm:$0xff]
    %v264 = vld [vmem:[%s3 + $0x70] sm:$0xff]
    %v265 = vld [vmem:[%s3 + $0x78] sm:$0xff]
    %v266 = vld [vmem:[%s4] sm:$0x1]
    %v268 = vlaneseq
    %v269 = vshrl.u32 %v268, 7
    %v270 = vsub.s32 0, %v269
    %v271 = vrot.slane %v266, %v270
    %273 = vmatprep.subr.mxu0 0.0
    %274 = vmatpush1.msra.mxu0 %v250
    %275 = vmatprep.subr.mxu0 0.0
    %276 = vmatpush1.msra.mxu0 %v251
    %277 = vmatprep.subr.mxu0 0.0
    %278 = vmatpush1.msra.mxu0 %v252
    %279 = vmatprep.subr.mxu0 0.0
    %280 = vmatpush1.msra.mxu0 %v253
    %281 = vmatprep.subr.mxu0 0.0
    %282 = vmatpush1.msra.mxu0 %v254
    %283 = vmatprep.subr.mxu0 0.0
    %284 = vmatpush1.msra.mxu0 %v255
    %285 = vmatprep.subr.mxu0 0.0
    %286 = vmatpush1.msra.mxu0 %v256
    %287 = vmatprep.subr.mxu0 0.0
    %288 = vmatpush1.msra.mxu0 %v257
    %289 = vmatprep.subr.mxu0 0.0
    %290 = vmatpush1.msra.mxu0 %v258
    %291 = vmatprep.subr.mxu0 0.0
    %292 = vmatpush1.msra.mxu0 %v259
    %293 = vmatprep.subr.mxu0 0.0
    %294 = vmatpush1.msra.mxu0 %v260
    %295 = vmatprep.subr.mxu0 0.0
    %296 = vmatpush1.msra.mxu0 %v261
    %297 = vmatprep.subr.mxu0 0.0
    %298 = vmatpush1.msra.mxu0 %v262
    %299 = vmatprep.subr.mxu0 0.0
    %300 = vmatpush1.msra.mxu0 %v263
    %301 = vmatprep.subr.mxu0 0.0
    %302 = vmatpush1.msra.mxu0 %v264
    %303 = vmatprep.subr.mxu0 0.0
    %304 = vmatpush1.msra.mxu0 %v265
    %305 = vmatprep.subr.mxu0 0.0
    %306 = vmatpush1.msra.mxu0 0.0
    %307 = vmatprep.subr.mxu0 0.0
    %308 = vmatpush1.msra.mxu0 0.0
    %309 = vmatprep.subr.mxu0 0.0
    %310 = vmatpush1.msra.mxu0 0.0
    %311 = vmatprep.subr.mxu0 0.0
    %312 = vmatpush1.msra.mxu0 0.0
    %313 = vmatprep.subr.mxu0 0.0
    %314 = vmatpush1.msra.mxu0 0.0
    %315 = vmatprep.subr.mxu0 0.0
    %316 = vmatpush1.msra.mxu0 0.0
    %317 = vmatprep.subr.mxu0 0.0
    %318 = vmatpush1.msra.mxu0 0.0
    %319 = vmatprep.subr.mxu0 0.0
    %320 = vmatpush1.msra.mxu0 0.0
    %321 = vmatprep.subr.mxu0 0.0
    %322 = vmatpush1.msra.mxu0 0.0
    %323 = vmatprep.subr.mxu0 0.0
    %324 = vmatpush1.msra.mxu0 0.0
    %325 = vmatprep.subr.mxu0 0.0
    %326 = vmatpush1.msra.mxu0 0.0
    %327 = vmatprep.subr.mxu0 0.0
    %328 = vmatpush1.msra.mxu0 0.0
    %329 = vmatprep.subr.mxu0 0.0
    %330 = vmatpush1.msra.mxu0 0.0
    %331 = vmatprep.subr.mxu0 0.0
    %332 = vmatpush1.msra.mxu0 0.0
    %333 = vmatprep.subr.mxu0 0.0
    %334 = vmatpush1.msra.mxu0 0.0
    %335 = vmatprep.subr.mxu0 0.0
    %336 = vmatpush1.msra.mxu0 0.0
    %337 = vmatprep.mubr.f32.mxu0 0.0
    %338 = vmatmul.mubr.f32.gmra.mrb[0].mxu0 %v249
    %v339 = vpop.f32.mrb[0].mxu0
    %v340 = vadd.f32 %v271, %v339
    %v341 = vpop.f32.mrb[0].mxu0
    %342 = vdwg.mxu0
    %v343 = vmax.f32 %v340, 0.0
    %v344 = vld [vmem:[%s5] sm:$0xff]
    %v345 = vld [vmem:[%s5 + $0x8] sm:$0xff]
    %v346 = vld [vmem:[%s5 + $0x10] sm:$0xff]
    %v347 = vld [vmem:[%s5 + $0x18] sm:$0xff]
    %v348 = vld [vmem:[%s5 + $0x20] sm:$0xff]
    %v349 = vld [vmem:[%s5 + $0x28] sm:$0xff]
    %v350 = vld [vmem:[%s5 + $0x30] sm:$0xff]
    %v351 = vld [vmem:[%s5 + $0x38] sm:$0xff]
    %v352 = vld [vmem:[%s5 + $0x40] sm:$0xff]
    %v353 = vld [vmem:[%s5 + $0x48] sm:$0xff]
    %v354 = vld [vmem:[%s5 + $0x50] sm:$0xff]
    %v355 = vld [vmem:[%s5 + $0x58] sm:$0xff]
    %v356 = vld [vmem:[%s5 + $0x60] sm:$0xff]
    %v357 = vld [vmem:[%s5 + $0x68] sm:$0xff]
    %v358 = vld [vmem:[%s5 + $0x70] sm:$0xff]
    %v359 = vld [vmem:[%s5 + $0x78] sm:$0xff]
    %v360 = vld [vmem:[%s6] sm:$0x1]
    %v362 = vlaneseq
    %v363 = vshrl.u32 %v362, 7
    %v364 = vsub.s32 0, %v363
    %v365 = vrot.slane %v360, %v364
    %367 = vmatprep.subr.mxu0 0.0
    %368 = vmatpush1.msra.mxu0 %v344
    %369 = vmatprep.subr.mxu0 0.0
    %370 = vmatpush1.msra.mxu0 %v345
    %371 = vmatprep.subr.mxu0 0.0
    %372 = vmatpush1.msra.mxu0 %v346
    %373 = vmatprep.subr.mxu0 0.0
    %374 = vmatpush1.msra.mxu0 %v347
    %375 = vmatprep.subr.mxu0 0.0
    %376 = vmatpush1.msra.mxu0 %v348
    %377 = vmatprep.subr.mxu0 0.0
    %378 = vmatpush1.msra.mxu0 %v349
    %379 = vmatprep.subr.mxu0 0.0
    %380 = vmatpush1.msra.mxu0 %v350
    %381 = vmatprep.subr.mxu0 0.0
    %382 = vmatpush1.msra.mxu0 %v351
    %383 = vmatprep.subr.mxu0 0.0
    %384 = vmatpush1.msra.mxu0 %v352
    %385 = vmatprep.subr.mxu0 0.0
    %386 = vmatpush1.msra.mxu0 %v353
    %387 = vmatprep.subr.mxu0 0.0
    %388 = vmatpush1.msra.mxu0 %v354
    %389 = vmatprep.subr.mxu0 0.0
    %390 = vmatpush1.msra.mxu0 %v355
    %391 = vmatprep.subr.mxu0 0.0
    %392 = vmatpush1.msra.mxu0 %v356
    %393 = vmatprep.subr.mxu0 0.0
    %394 = vmatpush1.msra.mxu0 %v357
    %395 = vmatprep.subr.mxu0 0.0
    %396 = vmatpush1.msra.mxu0 %v358
    %397 = vmatprep.subr.mxu0 0.0
    %398 = vmatpush1.msra.mxu0 %v359
    %399 = vmatprep.subr.mxu0 0.0
    %400 = vmatpush1.msra.mxu0 0.0
    %401 = vmatprep.subr.mxu0 0.0
    %402 = vmatpush1.msra.mxu0 0.0
    %403 = vmatprep.subr.mxu0 0.0
    %404 = vmatpush1.msra.mxu0 0.0
    %405 = vmatprep.subr.mxu0 0.0
    %406 = vmatpush1.msra.mxu0 0.0
    %407 = vmatprep.subr.mxu0 0.0
    %408 = vmatpush1.msra.mxu0 0.0
    %409 = vmatprep.subr.mxu0 0.0
    %410 = vmatpush1.msra.mxu0 0.0
    %411 = vmatprep.subr.mxu0 0.0
    %412 = vmatpush1.msra.mxu0 0.0
    %413 = vmatprep.subr.mxu0 0.0
    %414 = vmatpush1.msra.mxu0 0.0
    %415 = vmatprep.subr.mxu0 0.0
    %416 = vmatpush1.msra.mxu0 0.0
    %417 = vmatprep.subr.mxu0 0.0
    %418 = vmatpush1.msra.mxu0 0.0
    %419 = vmatprep.subr.mxu0 0.0
    %420 = vmatpush1.msra.mxu0 0.0
    %421 = vmatprep.subr.mxu0 0.0
    %422 = vmatpush1.msra.mxu0 0.0
    %423 = vmatprep.subr.mxu0 0.0
    %424 = vmatpush1.msra.mxu0 0.0
    %425 = vmatprep.subr.mxu0 0.0
    %426 = vmatpush1.msra.mxu0 0.0
    %427 = vmatprep.subr.mxu0 0.0
    %428 = vmatpush1.msra.mxu0 0.0
    %429 = vmatprep.subr.mxu0 0.0
    %430 = vmatpush1.msra.mxu0 0.0
    %431 = vmatprep.mubr.f32.mxu0 0.0
    %432 = vmatmul.mubr.f32.gmra.mrb[0].mxu0 %v343
    %v433 = vpop.f32.mrb[0].mxu0
    %v434 = vadd.f32 %v365, %v433
    %v435 = vpop.f32.mrb[0].mxu0
    %436 = vdwg.mxu0
    %v437 = vmax.f32 %v434, 0.0
    %438 = vst [vmem:[#allocation2] sm:$0x3] %v437
    // Predicated region
    $region30: #{net_forward.5} parent=1 // pred_check
      _
    $region31: #{net_forward.5} parent=1 // pred_check_branch
      %440 = sbr.rel (0) target = $region33
    $region32: #{net_forward.5} parent=1 // pred_region
      %s442 = ssub.s32 32, 32
      %443 = vsyncadd [#allocation3], %s442
      %s445 = sshll.u32 [#allocation2], 4
      %s446 = int_to_ptr.vmem [resolvable:$true] %s445
      %448 = dma.vmem_to_hbm [thread:$0]  %s446, 32, %s7, [#allocation3]
    $region33: #{net_forward.5} parent=1 // pred_fallthru
      _
    // Predicated region
    $region34: #{net_forward.5} parent=1 // pred_check
      _
    $region35: #{net_forward.5} parent=1 // pred_check_branch
      %450 = sbr.rel (0) target = $region37
    $region36: #{net_forward.5} parent=1 // pred_region
      %451 = dma.done [#allocation3], 32
    $region37: #{net_forward.5} parent=1 // pred_fallthru
      _
    %452 = vsyncpa [#allocation3], 1

</llo_original>
